<compile_context>
chip_gen: v7x
topology: tpu7x:2x2x1
jax: 0.10.0
libtpu: 0.0.40
codegen_flags: <defaults>
</compile_context>

<pallas_src>
import jax
import jax.numpy as jnp
from jax.experimental import pallas as pl
from jax.experimental.pallas import tpu as pltpu

KH = KW = 3
CIN = 3
COUT = 32


def conv3x3_kernel(x_ref, w_ref, b_ref, o_ref, xpad_ref):
    """3x3 'same' conv, one image per grid step, single im2col matmul.

    x_ref:    (1, CIN, H, W)      NCHW input tile (W on the lane axis)
    w_ref:    (COUT, KH*KW*CIN)   weight, rows ordered (kh, kw, c)
    b_ref:    (COUT, 1)           bias
    o_ref:    (1, COUT, H*W)      lane-dense output (NCHW, spatial flattened)
    xpad_ref: (CIN, H+2, W+2)     VMEM scratch for the zero-padded halo
    """
    H = x_ref.shape[2]
    W = x_ref.shape[3]

    # Build the zero-padded input in VMEM (no HBM pad round trip).
    xpad_ref[...] = jnp.zeros_like(xpad_ref)
    xpad_ref[:, 1:H + 1, 1:W + 1] = x_ref[0]
    xp = xpad_ref[...]                                   # (CIN, H+2, W+2)

    # im2col slab: rows ordered (kh, kw, c) to match the weight reshape.
    taps = []
    for kh in range(KH):
        for kw in range(KW):
            taps.append(xp[:, kh:kh + H, kw:kw + W].reshape(CIN, H * W))
    patches = jnp.concatenate(taps, axis=0)              # (KH*KW*CIN, H*W)

    # One MXU matmul: (COUT, 27) x (27, H*W) -> (COUT, H*W), f32 accumulate.
    acc = jnp.dot(w_ref[...], patches, preferred_element_type=jnp.float32)
    acc = acc + b_ref[...]                               # (COUT, 1) broadcast
    o_ref[0] = acc.astype(o_ref.dtype)


def conv2d_3x32(x_nchw, w_hwio, bias):
    """x_nchw: (N, CIN, H, W) float32 -> (N, COUT, H, W)."""
    N, C, H, W = x_nchw.shape
    assert C == CIN
    # HWIO (KH, KW, CIN, COUT) -> (COUT, KH*KW*CIN), row order (kh, kw, c).
    w_t = jnp.transpose(w_hwio, (3, 0, 1, 2)).reshape(COUT, KH * KW * CIN)
    b2 = bias.reshape(COUT, 1)

    out_flat = pl.pallas_call(
        conv3x3_kernel,
        out_shape=jax.ShapeDtypeStruct((N, COUT, H * W), x_nchw.dtype),
        grid_spec=pltpu.PrefetchScalarGridSpec(
            num_scalar_prefetch=0,
            grid=(N,),
            in_specs=[
                pl.BlockSpec((1, CIN, H, W), lambda n: (n, 0, 0, 0)),
                pl.BlockSpec((COUT, KH * KW * CIN), lambda n: (0, 0)),
                pl.BlockSpec((COUT, 1), lambda n: (0, 0)),
            ],
            out_specs=pl.BlockSpec((1, COUT, H * W), lambda n: (n, 0, 0)),
            scratch_shapes=[pltpu.VMEM((CIN, H + 2, W + 2), jnp.float32)],
        ),
        compiler_params=pltpu.CompilerParams(
            dimension_semantics=("parallel",)),
    )(x_nchw, w_t, b2)

    # Metadata-only reshape back to (N, COUT, H, W).
    return out_flat.reshape(N, COUT, H, W)


def model_forward(x_nchw, w_hwio, bias):
    """Reproduces Model.forward semantics.

    x_nchw: (N, 3, H, W) float32
    returns (conv_out (N, 32, H, W), tuple of 3 (N, 1, H, W) splits)
    """
    # torch.split(input, [1,1,1], dim=1) -> plain slices (views).
    split_tensors = (x_nchw[:, 0:1], x_nchw[:, 1:2], x_nchw[:, 2:3])
    # torch.cat(split_tensors, dim=1) == x_nchw -> identity, not materialized.
    conv_out = conv2d_3x32(x_nchw, w_hwio, bias)
    return conv_out, split_tensors


def _reference_conv(x_nchw, w_hwio, bias):
    """Pure-JAX reference (lax conv) for a correctness check."""
    w_oihw = jnp.transpose(w_hwio, (3, 2, 0, 1))  # HWIO -> OIHW
    out = jax.lax.conv_general_dilated(
        x_nchw, w_oihw, window_strides=(1, 1), padding="SAME",
        dimension_numbers=("NCHW", "OIHW", "NCHW"))
    return out + bias.reshape(1, COUT, 1, 1)


if __name__ == "__main__":
    key = jax.random.PRNGKey(0)
    k_x, k_w, k_b = jax.random.split(key, 3)

    N, H, W = 2, 16, 16
    x = jax.random.normal(k_x, (N, CIN, H, W), dtype=jnp.float32)

    # Deterministic parameter init mimicking PyTorch Conv2d defaults:
    # U(-b, b) with b = 1/sqrt(fan_in).
    fan_in = CIN * KH * KW
    bound = 1.0 / (fan_in ** 0.5)
    w_hwio = jax.random.uniform(k_w, (KH, KW, CIN, COUT),
                                minval=-bound, maxval=bound,
                                dtype=jnp.float32)
    bias = jax.random.uniform(k_b, (COUT,), minval=-bound, maxval=bound,
                              dtype=jnp.float32)

    conv_out, splits = jax.block_until_ready(
        jax.jit(model_forward)(x, w_hwio, bias))

    # Sanity checks vs. pure-JAX reference and split semantics.
    ref = _reference_conv(x, w_hwio, bias)
    assert conv_out.shape == (N, COUT, H, W)
    assert jnp.allclose(conv_out, ref, atol=1e-4, rtol=1e-4)
    assert len(splits) == 3 and all(s.shape == (N, 1, H, W) for s in splits)
    assert jnp.array_equal(jnp.concatenate(splits, axis=1), x)

    print("KERNEL_OK")
</pallas_src>

<mosaic_0001>
module attributes {stable_mosaic.version = 11 : i64} {
  func.func @conv3x3_kernel(%arg0: i32, %arg1: memref<1x3x16x16xf32, #tpu.memory_space<vmem>>, %arg2: memref<32x27xf32, #tpu.memory_space<vmem>>, %arg3: memref<32x1xf32, #tpu.memory_space<vmem>>, %arg4: memref<1x32x256xf32, #tpu.memory_space<vmem>>, %arg5: memref<3x18x18xf32, #tpu.memory_space<vmem>>) attributes {dimension_semantics = [#tpu.dimension_semantics<parallel>], iteration_bounds = array<i64: 2>, scalar_prefetch = 0 : i64, scratch_operands = 1 : i64, tpu.core_type = #tpu.core_type<tc>, window_params = [{transform_indices = @transform_0, window_bounds = array<i64: 1, 3, 16, 16>}, {pipeline_mode = #tpu.pipeline_mode<synchronous>, transform_indices = @transform_1, window_bounds = array<i64: 32, 27>}, {pipeline_mode = #tpu.pipeline_mode<synchronous>, transform_indices = @transform_2, window_bounds = array<i64: 32, 1>}, {transform_indices = @transform_3, window_bounds = array<i64: 1, 32, 256>}]} {
    %cst = arith.constant 0.000000e+00 : f32
    %0 = vector.broadcast %cst : f32 to vector<3x18x18xf32>
    %c0 = arith.constant 0 : index
    %c0_0 = arith.constant 0 : index
    %c0_1 = arith.constant 0 : index
    %1 = vector.load %arg5[%c0, %c0_0, %c0_1] : memref<3x18x18xf32, #tpu.memory_space<vmem>>, vector<3x18x18xf32>
    tpu.vector_store %arg5[%c0, %c0_0, %c0_1], %0 {strides = array<i32>} : memref<3x18x18xf32, #tpu.memory_space<vmem>>, vector<3x18x18xf32>,
    %c0_2 = arith.constant 0 : index
    %c0_3 = arith.constant 0 : index
    %c0_4 = arith.constant 0 : index
    %c0_5 = arith.constant 0 : index
    %2 = vector.load %arg1[%c0_2, %c0_3, %c0_4, %c0_5] : memref<1x3x16x16xf32, #tpu.memory_space<vmem>>, vector<1x3x16x16xf32>
    %3 = vector.shape_cast %2 : vector<1x3x16x16xf32> to vector<3x16x16xf32>
    %c0_6 = arith.constant 0 : index
    %c1 = arith.constant 1 : index
    %c1_7 = arith.constant 1 : index
    %4 = vector.load %arg5[%c0_6, %c1, %c1_7] : memref<3x18x18xf32, #tpu.memory_space<vmem>>, vector<3x16x16xf32>
    tpu.vector_store %arg5[%c0_6, %c1, %c1_7], %3 {strides = array<i32>} : memref<3x18x18xf32, #tpu.memory_space<vmem>>, vector<3x16x16xf32>,
    %c0_8 = arith.constant 0 : index
    %c0_9 = arith.constant 0 : index
    %c0_10 = arith.constant 0 : index
    %5 = vector.load %arg5[%c0_8, %c0_9, %c0_10] : memref<3x18x18xf32, #tpu.memory_space<vmem>>, vector<3x18x18xf32>
    %6 = vector.extract_strided_slice %5 {offsets = [0, 0, 0], sizes = [3, 16, 16], strides = [1, 1, 1]} : vector<3x18x18xf32> to vector<3x16x16xf32>
    %7 = vector.shape_cast %6 : vector<3x16x16xf32> to vector<3x256xf32>
    %8 = vector.extract_strided_slice %5 {offsets = [0, 0, 1], sizes = [3, 16, 16], strides = [1, 1, 1]} : vector<3x18x18xf32> to vector<3x16x16xf32>
    %9 = vector.shape_cast %8 : vector<3x16x16xf32> to vector<3x256xf32>
    %10 = vector.extract_strided_slice %5 {offsets = [0, 0, 2], sizes = [3, 16, 16], strides = [1, 1, 1]} : vector<3x18x18xf32> to vector<3x16x16xf32>
    %11 = vector.shape_cast %10 : vector<3x16x16xf32> to vector<3x256xf32>
    %12 = vector.extract_strided_slice %5 {offsets = [0, 1, 0], sizes = [3, 16, 16], strides = [1, 1, 1]} : vector<3x18x18xf32> to vector<3x16x16xf32>
    %13 = vector.shape_cast %12 : vector<3x16x16xf32> to vector<3x256xf32>
    %14 = vector.extract_strided_slice %5 {offsets = [0, 1, 1], sizes = [3, 16, 16], strides = [1, 1, 1]} : vector<3x18x18xf32> to vector<3x16x16xf32>
    %15 = vector.shape_cast %14 : vector<3x16x16xf32> to vector<3x256xf32>
    %16 = vector.extract_strided_slice %5 {offsets = [0, 1, 2], sizes = [3, 16, 16], strides = [1, 1, 1]} : vector<3x18x18xf32> to vector<3x16x16xf32>
    %17 = vector.shape_cast %16 : vector<3x16x16xf32> to vector<3x256xf32>
    %18 = vector.extract_strided_slice %5 {offsets = [0, 2, 0], sizes = [3, 16, 16], strides = [1, 1, 1]} : vector<3x18x18xf32> to vector<3x16x16xf32>
    %19 = vector.shape_cast %18 : vector<3x16x16xf32> to vector<3x256xf32>
    %20 = vector.extract_strided_slice %5 {offsets = [0, 2, 1], sizes = [3, 16, 16], strides = [1, 1, 1]} : vector<3x18x18xf32> to vector<3x16x16xf32>
    %21 = vector.shape_cast %20 : vector<3x16x16xf32> to vector<3x256xf32>
    %22 = vector.extract_strided_slice %5 {offsets = [0, 2, 2], sizes = [3, 16, 16], strides = [1, 1, 1]} : vector<3x18x18xf32> to vector<3x16x16xf32>
    %23 = vector.shape_cast %22 : vector<3x16x16xf32> to vector<3x256xf32>
    %24 = tpu.concatenate %7, %9, %11, %13, %15, %17, %19, %21, %23 in 0 : vector<3x256xf32>, vector<3x256xf32>, vector<3x256xf32>, vector<3x256xf32>, vector<3x256xf32>, vector<3x256xf32>, vector<3x256xf32>, vector<3x256xf32>, vector<3x256xf32> -> vector<27x256xf32>
    %c0_11 = arith.constant 0 : index
    %c0_12 = arith.constant 0 : index
    %25 = vector.load %arg2[%c0_11, %c0_12] : memref<32x27xf32, #tpu.memory_space<vmem>>, vector<32x27xf32>
    %cst_13 = arith.constant dense<0.000000e+00> : vector<32x256xf32>
    %26 = tpu.matmul %25, %24, %cst_13 {dimension_numbers = #tpu.dot_dimension_numbers<[1], [0], [0], [1], [0, 0, 1, 1], [], []>} : vector<32x27xf32>, vector<27x256xf32>, vector<32x256xf32> -> vector<32x256xf32>
    %c0_14 = arith.constant 0 : index
    %c0_15 = arith.constant 0 : index
    %27 = vector.load %arg3[%c0_14, %c0_15] : memref<32x1xf32, #tpu.memory_space<vmem>>, vector<32x1xf32>
    %28 = vector.broadcast %27 : vector<32x1xf32> to vector<32x256xf32>
    %29 = arith.addf %26, %28 : vector<32x256xf32>
    %c0_16 = arith.constant 0 : index
    %c0_17 = arith.constant 0 : index
    %c0_18 = arith.constant 0 : index
    %30 = vector.load %arg4[%c0_16, %c0_17, %c0_18] : memref<1x32x256xf32, #tpu.memory_space<vmem>>, vector<1x32x256xf32>
    %31 = vector.shape_cast %30 : vector<1x32x256xf32> to vector<32x256xf32>
    %32 = vector.shape_cast %29 : vector<32x256xf32> to vector<1x32x256xf32>
    tpu.vector_store %arg4[%c0_16, %c0_17, %c0_18], %32 {strides = array<i32>} : memref<1x32x256xf32, #tpu.memory_space<vmem>>, vector<1x32x256xf32>,
    return
  }
  func.func @transform_0(%arg0: i32) -> (i32, i32, i32, i32) {
    %c0_i32 = arith.constant 0 : i32
    %c0_i32_0 = arith.constant 0 : i32
    %c0_i32_1 = arith.constant 0 : i32
    %c0_i32_2 = arith.constant 0 : i32
    return %arg0, %c0_i32, %c0_i32_0, %c0_i32_1 : i32, i32, i32, i32
  }
  func.func @transform_1(%arg0: i32) -> (i32, i32) {
    %c0_i32 = arith.constant 0 : i32
    %c0_i32_0 = arith.constant 0 : i32
    %c0_i32_1 = arith.constant 0 : i32
    return %c0_i32, %c0_i32_0 : i32, i32
  }
  func.func @transform_2(%arg0: i32) -> (i32, i32) {
    %c0_i32 = arith.constant 0 : i32
    %c0_i32_0 = arith.constant 0 : i32
    %c0_i32_1 = arith.constant 0 : i32
    return %c0_i32, %c0_i32_0 : i32, i32
  }
  func.func @transform_3(%arg0: i32) -> (i32, i32, i32) {
    %c0_i32 = arith.constant 0 : i32
    %c0_i32_0 = arith.constant 0 : i32
    %c0_i32_1 = arith.constant 0 : i32
    return %arg0, %c0_i32, %c0_i32_0 : i32, i32, i32
  }
}

</mosaic_0001>

<llo_original>
// kernel: model_forward.1
$region0: #{model_forward.1}
  #allocation0 [shape = 'u32[]', space=smem, size = 0x4, offset = 0x4, fixed_abs, tag = 'smem constant byte address 0x4 - core index']
  #allocation1 [shape = 'u32[144,128]{1,0:T(1,128)}', space=vmem, size = 0x12000, scoped, tag = 'internal scratch']
  #allocation2 [shape = 'f32[3,18,18]{2,1,0:T(8,128)}', space=vmem, size = 0x9000, scoped, tag = 'scratch operand']
  %s0 = inlined_call_operand.vmem [shape: f32[2,3,16,16], index: 0, kind: input, shape index: {}]
  %s1 = inlined_call_operand.vmem [shape: f32[32,27], index: 1, kind: input, shape index: {}]
  %s2 = inlined_call_operand.vmem [shape: f32[32,1], index: 2, kind: input, shape index: {}]
  %s3 = inlined_call_operand.vmem [shape: f32[2,32,256], index: 3, kind: output, shape index: {}]
  %s4 = sld [smem:[#allocation0]]
  $region45: #{model_forward.1} parent=0
    _
  %s6 = ssub.s32 1, %s4
  %s7 = scalar_select 0, %s6, %s4
  loop: start=0, step=1, limit=4
  $region2: #{model_forward.1} parent=0 // loop_pre_header
    _
  $region3: #{model_forward.1} parent=0 // loop_header
    %s9 = sphi 0, %s13
    %p10 = scmp.ge.s32.totalorder %s9, 4
    %s19 = sphi 0, %s21
    %s22 = sphi 0, %s19
    %s23 = sphi 0, %s22
    %s39 = sphi 0, %s23
    %s43 = sphi 0, %s43
    %s45 = sphi 0, %s43
    %s46 = sphi 0, %s45
    %s60 = sphi 0, %s46
    %s64 = sphi 0, %s64
    %s66 = sphi 0, %s64
    %s67 = sphi 0, %s66
    %s81 = sphi 0, %s67
    %s87 = sphi 0, %s89
    %s90 = sphi 0, %s87
    %s91 = sphi 0, %s90
    %s107 = sphi 0, %s91
  $region4: #{model_forward.1} parent=0 // loop_header_branch
    %12 = sbr.rel (%p10) target = $region8
  $region5: #{model_forward.1} parent=0 // loop_body
    %s14 = ssub.s32 %s9, 1
    %s15 = ssub.s32 %s9, 2
    %s16 = sadd.s32 %s9, 1
    %s17 = ssub.s32 %s9, %s16
    %p18 = scmp.eq.s32.totalorder %s17, 0
    %s20 = sadd.s32 %s19, 1
    %s21 = scalar_select %p18, %s19, %s20
    %p24 = pneg %p18
    %p25 = scmp.eq.s32.totalorder %s9, 1
    %p26 = por %p24, %p25
    %p27 = scmp.ne.s32.totalorder %s19, %s22
    %p28 = scmp.eq.s32.totalorder %s9, 0
    %p29 = por %p27, %p28
    %p30 = scmp.ne.s32.totalorder %s19, %s22
    %p31 = scmp.eq.s32.totalorder %s14, 1
    %p32 = por %p30, %p31
    %p33 = scmp.ne.s32.totalorder %s22, %s23
    %p34 = scmp.eq.s32.totalorder %s14, 0
    %p35 = por %p33, %p34
    %p36 = scmp.ne.s32.totalorder %s22, %s23
    %p37 = scmp.eq.s32.totalorder %s15, 1
    %p38 = por %p36, %p37
    %p40 = scmp.ne.s32.totalorder %s23, %s39
    %p41 = scmp.eq.s32.totalorder %s15, 0
    %p42 = por %p40, %p41
    %s44 = sadd.s32 %s43, 1
    %p47 = scmp.eq.s32.totalorder %s9, 1
    %p48 = scmp.ne.s32.totalorder %s43, %s45
    %p49 = scmp.eq.s32.totalorder %s9, 0
    %p50 = por %p48, %p49
    %p51 = scmp.ne.s32.totalorder %s43, %s45
    %p52 = scmp.eq.s32.totalorder %s14, 1
    %p53 = por %p51, %p52
    %p54 = scmp.ne.s32.totalorder %s45, %s46
    %p55 = scmp.eq.s32.totalorder %s14, 0
    %p56 = por %p54, %p55
    %p57 = scmp.ne.s32.totalorder %s45, %s46
    %p58 = scmp.eq.s32.totalorder %s15, 1
    %p59 = por %p57, %p58
    %p61 = scmp.ne.s32.totalorder %s46, %s60
    %p62 = scmp.eq.s32.totalorder %s15, 0
    %p63 = por %p61, %p62
    %s65 = sadd.s32 %s64, 1
    %p68 = scmp.eq.s32.totalorder %s9, 1
    %p69 = scmp.ne.s32.totalorder %s64, %s66
    %p70 = scmp.eq.s32.totalorder %s9, 0
    %p71 = por %p69, %p70
    %p72 = scmp.ne.s32.totalorder %s64, %s66
    %p73 = scmp.eq.s32.totalorder %s14, 1
    %p74 = por %p72, %p73
    %p75 = scmp.ne.s32.totalorder %s66, %s67
    %p76 = scmp.eq.s32.totalorder %s14, 0
    %p77 = por %p75, %p76
    %p78 = scmp.ne.s32.totalorder %s66, %s67
    %p79 = scmp.eq.s32.totalorder %s15, 1
    %p80 = por %p78, %p79
    %p82 = scmp.ne.s32.totalorder %s67, %s81
    %p83 = scmp.eq.s32.totalorder %s15, 0
    %p84 = por %p82, %p83
    %s85 = ssub.s32 %s9, %s16
    %p86 = scmp.eq.s32.totalorder %s85, 0
    %s88 = sadd.s32 %s87, 1
    %s89 = scalar_select %p86, %s87, %s88
    %p92 = pneg %p86
    %p93 = scmp.eq.s32.totalorder %s9, 1
    %p94 = por %p92, %p93
    %p95 = scmp.ne.s32.totalorder %s87, %s90
    %p96 = scmp.eq.s32.totalorder %s9, 0
    %p97 = por %p95, %p96
    %p98 = scmp.ne.s32.totalorder %s87, %s90
    %p99 = scmp.eq.s32.totalorder %s14, 1
    %p100 = por %p98, %p99
    %p101 = scmp.ne.s32.totalorder %s90, %s91
    %p102 = scmp.eq.s32.totalorder %s14, 0
    %p103 = por %p101, %p102
    %p104 = scmp.ne.s32.totalorder %s90, %s91
    %p105 = scmp.eq.s32.totalorder %s15, 1
    %p106 = por %p104, %p105
    %p108 = scmp.ne.s32.totalorder %s91, %s107
    %p109 = scmp.eq.s32.totalorder %s15, 0
    %p110 = por %p108, %p109
    %p111 = scmp.le.s32.totalorder 1, %s9
    %p112 = scmp.lt.s32.totalorder %s9, 3
    %p113 = pnand %p111, %p112
    %p114 = pneg %p113
    // Predicated region
    $region9: #{model_forward.1} parent=5 // pred_check
      _
    $region10: #{model_forward.1} parent=5 // pred_check_branch
      %116 = sbr.rel (%p113) target = $region12
    $region11: #{model_forward.1} parent=5 // pred_region
      %s117 = ssub.s32 %s9, 1
      // Predicated region
      $region13: #{model_forward.1} parent=11 // pred_check
        %p118 = pneg %p56
      $region14: #{model_forward.1} parent=11 // pred_check_branch
        %120 = sbr.rel (%p118) target = $region16
      $region15: #{model_forward.1} parent=11 // pred_region
        _
      $region16: #{model_forward.1} parent=11 // pred_fallthru
        _
      // Predicated region
      $region17: #{model_forward.1} parent=11 // pred_check
        %p121 = pneg %p77
      $region18: #{model_forward.1} parent=11 // pred_check_branch
        %123 = sbr.rel (%p121) target = $region20
      $region19: #{model_forward.1} parent=11 // pred_region
        _
      $region20: #{model_forward.1} parent=11 // pred_fallthru
        _
    $region12: #{model_forward.1} parent=5 // pred_fallthru
      _
    %p124 = scmp.lt.s32.totalorder %s9, 2
    // Predicated region
    $region21: #{model_forward.1} parent=5 // pred_check
      %p125 = pneg %p124
    $region22: #{model_forward.1} parent=5 // pred_check_branch
      %127 = sbr.rel (%p125) target = $region24
    $region23: #{model_forward.1} parent=5 // pred_region
      // Predicated region
      $region25: #{model_forward.1} parent=23 // pred_check
        %p128 = pneg %p29
      $region26: #{model_forward.1} parent=23 // pred_check_branch
        %130 = sbr.rel (%p128) target = $region28
      $region27: #{model_forward.1} parent=23 // pred_region
        %p131 = scmp.lt.s32.totalorder %s9, 1
        %s132 = scalar_select %p131, %s9, 1
        %s133 = smul.addr %s132, 6
        %s134 = smul.addr %s133, 8
        %s135 = scalar_lea.vmem %s0, %s134
      $region28: #{model_forward.1} parent=23 // pred_fallthru
        _
    $region24: #{model_forward.1} parent=5 // pred_fallthru
      _
    %p136 = scmp.le.s32.totalorder 1, %s9
    %p137 = scmp.lt.s32.totalorder %s9, 3
    %p138 = pnand %p136, %p137
    %p139 = pneg %p138
    // Predicated region
    $region29: #{model_forward.1} parent=5 // pred_check
      _
    $region30: #{model_forward.1} parent=5 // pred_check_branch
      %141 = sbr.rel (%p138) target = $region32
    $region31: #{model_forward.1} parent=5 // pred_region
      %s142 = ssub.s32 %s9, 1
      %p143 = scmp.lt.s32.totalorder %s14, 1
      %s144 = scalar_select %p143, %s14, 1
      %s145 = smul.addr %s144, 6
      %s146 = smul.addr %s145, 8
      %s147 = scalar_lea.vmem %s0, %s146
      %p148 = pneg %p35
      %p149 = pneg %p32
      %p150 = pneg %p56
      %p151 = pneg %p53
      %p152 = pneg %p77
      %p153 = pneg %p74
      %p154 = pneg %p103
      %p155 = pneg %p100
      %p156 = scmp.lt.s32.totalorder %s14, 1
      %s157 = scalar_select %p156, %s14, 1
      %s158 = smul.addr %s157, 8
      %s159 = smul.addr %s158, 8
      %s160 = scalar_lea.vmem %s3, %s159
      %p161 = scmp.lt.s32.totalorder %s14, 1
      %s162 = scalar_select %p161, %s14, 1
      %s163 = smul.addr %s162, 6
      %s164 = smul.addr %s163, 8
      %s165 = scalar_lea.vmem %s0, %s164
      %p166 = scmp.lt.s32.totalorder %s14, 1
      %s167 = scalar_select %p166, %s14, 1
      %s168 = smul.addr %s167, 8
      %s169 = smul.addr %s168, 8
      %s170 = scalar_lea.vmem %s3, %s169
      %vm171 = vcmask 146432
      %172 = vst.msk [vmem:[#allocation2] sm:$0xff] %vm171, 0.0
      %173 = vst.msk [vmem:[#allocation2 + $0x8] sm:$0xff] %vm171, 0.0
      %vm174 = vcmask 140288
      %175 = vst.msk [vmem:[#allocation2 + $0x10] sm:$0x3] %vm174, 0.0
      %176 = vst.msk [vmem:[#allocation2 + $0x18] sm:$0xff] %vm171, 0.0
      %177 = vst.msk [vmem:[#allocation2 + $0x20] sm:$0xff] %vm171, 0.0
      %178 = vst.msk [vmem:[#allocation2 + $0x28] sm:$0x3] %vm174, 0.0
      %179 = vst.msk [vmem:[#allocation2 + $0x30] sm:$0xff] %vm171, 0.0
      %180 = vst.msk [vmem:[#allocation2 + $0x38] sm:$0xff] %vm171, 0.0
      %181 = vst.msk [vmem:[#allocation2 + $0x40] sm:$0x3] %vm174, 0.0
      %v182 = vld [vmem:[%s165] sm:$0xff]
      %v183 = vld [vmem:[%s165 + $0x8] sm:$0xff]
      %v184 = vld [vmem:[%s165 + $0x10] sm:$0xff]
      %v185 = vld [vmem:[%s165 + $0x18] sm:$0xff]
      %v186 = vld [vmem:[%s165 + $0x20] sm:$0xff]
      %v187 = vld [vmem:[%s165 + $0x28] sm:$0xff]
      %194 = vrot.lane.b32.xlu0 %v182, 1
      %v195 = vpop.permute.xlu0 %194
      %196 = vrot.lane.b32.xlu0 %v183, 1
      %v197 = vpop.permute.xlu0 %196
      %198 = vrot.lane.b32.xlu0 %v184, 1
      %v199 = vpop.permute.xlu0 %198
      %200 = vrot.lane.b32.xlu0 %v185, 1
      %v201 = vpop.permute.xlu0 %200
      %202 = vrot.lane.b32.xlu0 %v186, 1
      %v203 = vpop.permute.xlu0 %202
      %204 = vrot.lane.b32.xlu0 %v187, 1
      %v205 = vpop.permute.xlu0 %204
      %vm212 = vcmask 138248
      %213 = vst.msk [vmem:[#allocation2 + $0x1] sm:$0xff] %vm212, %v195
      %214 = vst.msk [vmem:[#allocation2 + $0x9] sm:$0xff] %vm212, %v197
      %215 = vst.msk [vmem:[#allocation2 + $0x19] sm:$0xff] %vm212, %v199
      %216 = vst.msk [vmem:[#allocation2 + $0x21] sm:$0xff] %vm212, %v201
      %217 = vst.msk [vmem:[#allocation2 + $0x31] sm:$0xff] %vm212, %v203
      %218 = vst.msk [vmem:[#allocation2 + $0x39] sm:$0xff] %vm212, %v205
      %v219 = vld [vmem:[#allocation2] sm:$0xff]
      %v220 = vld [vmem:[#allocation2 + $0x8] sm:$0xff]
      %v221 = vld [vmem:[#allocation2 + $0x10] sm:$0x3]
      %v222 = vld [vmem:[#allocation2 + $0x18] sm:$0xff]
      %v223 = vld [vmem:[#allocation2 + $0x20] sm:$0xff]
      %v224 = vld [vmem:[#allocation2 + $0x28] sm:$0x3]
      %v225 = vld [vmem:[#allocation2 + $0x30] sm:$0xff]
      %v226 = vld [vmem:[#allocation2 + $0x38] sm:$0xff]
      %v227 = vld [vmem:[#allocation2 + $0x40] sm:$0x3]
      %v228 = vcombine.low %v219, %v225
      %v229 = vcombine.high %v219, %v225
      %v231 = vunpack.c.l.s4 1983009808
      %v232 = vunpack.c.0.s8 %v231
      %v233 = vlaneseq
      %v234 = vshrl.u32 %v233, 7
      %v235 = vsub.s32 %v232, %v234
      %v236 = vrot.slane %v228, %v235
      %v238 = vunpack.c.l.s4 1983009808
      %v239 = vunpack.c.0.s8 %v238
      %v240 = vlaneseq
      %v241 = vshrl.u32 %v240, 7
      %v242 = vsub.s32 %v239, %v241
      %v243 = vrot.slane %v229, %v242
      %v244 = vcombine.high %v222, 0.0
      %v246 = vunpack.c.l.s4 1983009808
      %v247 = vunpack.c.0.s8 %v246
      %v248 = vlaneseq
      %v249 = vshrl.u32 %v248, 7
      %v250 = vsub.s32 %v247, %v249
      %v251 = vrot.slane %v222, %v250
      %v253 = vunpack.c.l.s4 1983009808
      %v254 = vunpack.c.0.s8 %v253
      %v255 = vlaneseq
      %v256 = vshrl.u32 %v255, 7
      %v257 = vsub.s32 %v254, %v256
      %v258 = vrot.slane %v244, %v257
      %v259 = vcombine.low %v236, %v251
      %v260 = vcombine.high %v236, %v251
      %v262 = vunpack.c.l.s4 1934713408
      %v263 = vunpack.c.0.s8 %v262
      %v264 = vlaneseq
      %v265 = vshrl.u32 %v264, 7
      %v266 = vsub.s32 %v263, %v265
      %v267 = vrot.slane %v259, %v266
      %v269 = vunpack.c.l.s4 1934713408
      %v270 = vunpack.c.0.s8 %v269
      %v271 = vlaneseq
      %v272 = vshrl.u32 %v271, 7
      %v273 = vsub.s32 %v270, %v272
      %v274 = vrot.slane %v260, %v273
      %v275 = vcombine.low %v243, %v258
      %v276 = vcombine.high %v243, %v258
      %v278 = vunpack.c.l.s4 1934713408
      %v279 = vunpack.c.0.s8 %v278
      %v280 = vlaneseq
      %v281 = vshrl.u32 %v280, 7
      %v282 = vsub.s32 %v279, %v281
      %v283 = vrot.slane %v275, %v282
      %v285 = vunpack.c.l.s4 1934713408
      %v286 = vunpack.c.0.s8 %v285
      %v287 = vlaneseq
      %v288 = vshrl.u32 %v287, 7
      %v289 = vsub.s32 %v286, %v288
      %v290 = vrot.slane %v276, %v289
      %v291 = vcombine.high %v267, 0.0
      %v292 = vcombine.high %v274, 0.0
      %v293 = vcombine.high %v283, 0.0
      %v294 = vcombine.high %v290, 0.0
      %v295 = vcombine.low %v220, %v226
      %v296 = vcombine.high %v220, %v226
      %v298 = vunpack.c.l.s4 1983009808
      %v299 = vunpack.c.0.s8 %v298
      %v300 = vlaneseq
      %v301 = vshrl.u32 %v300, 7
      %v302 = vsub.s32 %v299, %v301
      %v303 = vrot.slane %v295, %v302
      %v305 = vunpack.c.l.s4 1983009808
      %v306 = vunpack.c.0.s8 %v305
      %v307 = vlaneseq
      %v308 = vshrl.u32 %v307, 7
      %v309 = vsub.s32 %v306, %v308
      %v310 = vrot.slane %v296, %v309
      %v311 = vcombine.high %v223, 0.0
      %v313 = vunpack.c.l.s4 1983009808
      %v314 = vunpack.c.0.s8 %v313
      %v315 = vlaneseq
      %v316 = vshrl.u32 %v315, 7
      %v317 = vsub.s32 %v314, %v316
      %v318 = vrot.slane %v223, %v317
      %v320 = vunpack.c.l.s4 1983009808
      %v321 = vunpack.c.0.s8 %v320
      %v322 = vlaneseq
      %v323 = vshrl.u32 %v322, 7
      %v324 = vsub.s32 %v321, %v323
      %v325 = vrot.slane %v311, %v324
      %v326 = vcombine.low %v303, %v318
      %v327 = vcombine.high %v303, %v318
      %v329 = vunpack.c.l.s4 1934713408
      %v330 = vunpack.c.0.s8 %v329
      %v331 = vlaneseq
      %v332 = vshrl.u32 %v331, 7
      %v333 = vsub.s32 %v330, %v332
      %v334 = vrot.slane %v326, %v333
      %v336 = vunpack.c.l.s4 1934713408
      %v337 = vunpack.c.0.s8 %v336
      %v338 = vlaneseq
      %v339 = vshrl.u32 %v338, 7
      %v340 = vsub.s32 %v337, %v339
      %v341 = vrot.slane %v327, %v340
      %v342 = vcombine.low %v310, %v325
      %v343 = vcombine.high %v310, %v325
      %v345 = vunpack.c.l.s4 1934713408
      %v346 = vunpack.c.0.s8 %v345
      %v347 = vlaneseq
      %v348 = vshrl.u32 %v347, 7
      %v349 = vsub.s32 %v346, %v348
      %v350 = vrot.slane %v342, %v349
      %v352 = vunpack.c.l.s4 1934713408
      %v353 = vunpack.c.0.s8 %v352
      %v354 = vlaneseq
      %v355 = vshrl.u32 %v354, 7
      %v356 = vsub.s32 %v353, %v355
      %v357 = vrot.slane %v343, %v356
      %v358 = vcombine.high %v334, 0.0
      %v359 = vcombine.high %v341, 0.0
      %v360 = vcombine.high %v350, 0.0
      %v361 = vcombine.high %v357, 0.0
      %363 = vrot.lane.b32.xlu0 %v291, 16
      %v364 = vpop.permute.xlu0 %363
      %367 = vrot.lane.b32.xlu0 %v274, 32
      %v368 = vpop.permute.xlu0 %367
      %371 = vrot.lane.b32.xlu0 %v292, 48
      %v372 = vpop.permute.xlu0 %371
      %375 = vrot.lane.b32.xlu0 %v283, 64
      %v376 = vpop.permute.xlu0 %375
      %379 = vrot.lane.b32.xlu0 %v293, 80
      %v380 = vpop.permute.xlu0 %379
      %383 = vrot.lane.b32.xlu0 %v290, 96
      %v384 = vpop.permute.xlu0 %383
      %387 = vrot.lane.b32.xlu0 %v294, 112
      %v388 = vpop.permute.xlu0 %387
      %391 = vrot.lane.b32.xlu0 %v358, 16
      %v392 = vpop.permute.xlu0 %391
      %395 = vrot.lane.b32.xlu0 %v341, 32
      %v396 = vpop.permute.xlu0 %395
      %399 = vrot.lane.b32.xlu0 %v359, 48
      %v400 = vpop.permute.xlu0 %399
      %403 = vrot.lane.b32.xlu0 %v350, 64
      %v404 = vpop.permute.xlu0 %403
      %407 = vrot.lane.b32.xlu0 %v360, 80
      %v408 = vpop.permute.xlu0 %407
      %411 = vrot.lane.b32.xlu0 %v357, 96
      %v412 = vpop.permute.xlu0 %411
      %415 = vrot.lane.b32.xlu0 %v361, 112
      %v416 = vpop.permute.xlu0 %415
      %vm418 = vcmask 130048
      %v419 = vsel %vm418, %v267, %v364
      %vm420 = vcmask 261120
      %v421 = vsel %vm420, %v419, %v368
      %vm422 = vcmask 392192
      %v423 = vsel %vm422, %v421, %v372
      %vm424 = vcmask 523264
      %v425 = vsel %vm424, %v423, %v376
      %vm426 = vcmask 654336
      %v427 = vsel %vm426, %v425, %v380
      %vm428 = vcmask 785408
      %v429 = vsel %vm428, %v427, %v384
      %vm430 = vcmask 916480
      %v431 = vsel %vm430, %v429, %v388
      %v432 = vsel %vm418, %v334, %v392
      %v433 = vsel %vm420, %v432, %v396
      %v434 = vsel %vm422, %v433, %v400
      %v435 = vsel %vm424, %v434, %v404
      %v436 = vsel %vm426, %v435, %v408
      %v437 = vsel %vm428, %v436, %v412
      %v438 = vsel %vm430, %v437, %v416
      %445 = vrot.lane.b32.xlu0 %v219, 127
      %v446 = vpop.permute.xlu0 %445
      %447 = vrot.lane.b32.xlu0 %v220, 127
      %v448 = vpop.permute.xlu0 %447
      %449 = vrot.lane.b32.xlu0 %v222, 127
      %v450 = vpop.permute.xlu0 %449
      %451 = vrot.lane.b32.xlu0 %v223, 127
      %v452 = vpop.permute.xlu0 %451
      %453 = vrot.lane.b32.xlu0 %v225, 127
      %v454 = vpop.permute.xlu0 %453
      %455 = vrot.lane.b32.xlu0 %v226, 127
      %v456 = vpop.permute.xlu0 %455
      %v463 = vcombine.low %v446, %v454
      %v464 = vcombine.high %v446, %v454
      %v466 = vunpack.c.l.s4 1983009808
      %v467 = vunpack.c.0.s8 %v466
      %v468 = vlaneseq
      %v469 = vshrl.u32 %v468, 7
      %v470 = vsub.s32 %v467, %v469
      %v471 = vrot.slane %v463, %v470
      %v473 = vunpack.c.l.s4 1983009808
      %v474 = vunpack.c.0.s8 %v473
      %v475 = vlaneseq
      %v476 = vshrl.u32 %v475, 7
      %v477 = vsub.s32 %v474, %v476
      %v478 = vrot.slane %v464, %v477
      %v479 = vcombine.high %v450, 0.0
      %v481 = vunpack.c.l.s4 1983009808
      %v482 = vunpack.c.0.s8 %v481
      %v483 = vlaneseq
      %v484 = vshrl.u32 %v483, 7
      %v485 = vsub.s32 %v482, %v484
      %v486 = vrot.slane %v450, %v485
      %v488 = vunpack.c.l.s4 1983009808
      %v489 = vunpack.c.0.s8 %v488
      %v490 = vlaneseq
      %v491 = vshrl.u32 %v490, 7
      %v492 = vsub.s32 %v489, %v491
      %v493 = vrot.slane %v479, %v492
      %v494 = vcombine.low %v471, %v486
      %v495 = vcombine.high %v471, %v486
      %v497 = vunpack.c.l.s4 1934713408
      %v498 = vunpack.c.0.s8 %v497
      %v499 = vlaneseq
      %v500 = vshrl.u32 %v499, 7
      %v501 = vsub.s32 %v498, %v500
      %v502 = vrot.slane %v494, %v501
      %v504 = vunpack.c.l.s4 1934713408
      %v505 = vunpack.c.0.s8 %v504
      %v506 = vlaneseq
      %v507 = vshrl.u32 %v506, 7
      %v508 = vsub.s32 %v505, %v507
      %v509 = vrot.slane %v495, %v508
      %v510 = vcombine.low %v478, %v493
      %v511 = vcombine.high %v478, %v493
      %v513 = vunpack.c.l.s4 1934713408
      %v514 = vunpack.c.0.s8 %v513
      %v515 = vlaneseq
      %v516 = vshrl.u32 %v515, 7
      %v517 = vsub.s32 %v514, %v516
      %v518 = vrot.slane %v510, %v517
      %v520 = vunpack.c.l.s4 1934713408
      %v521 = vunpack.c.0.s8 %v520
      %v522 = vlaneseq
      %v523 = vshrl.u32 %v522, 7
      %v524 = vsub.s32 %v521, %v523
      %v525 = vrot.slane %v511, %v524
      %v526 = vcombine.high %v502, 0.0
      %v527 = vcombine.high %v509, 0.0
      %v528 = vcombine.high %v518, 0.0
      %v529 = vcombine.high %v525, 0.0
      %v530 = vcombine.low %v448, %v456
      %v531 = vcombine.high %v448, %v456
      %v533 = vunpack.c.l.s4 1983009808
      %v534 = vunpack.c.0.s8 %v533
      %v535 = vlaneseq
      %v536 = vshrl.u32 %v535, 7
      %v537 = vsub.s32 %v534, %v536
      %v538 = vrot.slane %v530, %v537
      %v540 = vunpack.c.l.s4 1983009808
      %v541 = vunpack.c.0.s8 %v540
      %v542 = vlaneseq
      %v543 = vshrl.u32 %v542, 7
      %v544 = vsub.s32 %v541, %v543
      %v545 = vrot.slane %v531, %v544
      %v546 = vcombine.high %v452, 0.0
      %v548 = vunpack.c.l.s4 1983009808
      %v549 = vunpack.c.0.s8 %v548
      %v550 = vlaneseq
      %v551 = vshrl.u32 %v550, 7
      %v552 = vsub.s32 %v549, %v551
      %v553 = vrot.slane %v452, %v552
      %v555 = vunpack.c.l.s4 1983009808
      %v556 = vunpack.c.0.s8 %v555
      %v557 = vlaneseq
      %v558 = vshrl.u32 %v557, 7
      %v559 = vsub.s32 %v556, %v558
      %v560 = vrot.slane %v546, %v559
      %v561 = vcombine.low %v538, %v553
      %v562 = vcombine.high %v538, %v553
      %v564 = vunpack.c.l.s4 1934713408
      %v565 = vunpack.c.0.s8 %v564
      %v566 = vlaneseq
      %v567 = vshrl.u32 %v566, 7
      %v568 = vsub.s32 %v565, %v567
      %v569 = vrot.slane %v561, %v568
      %v571 = vunpack.c.l.s4 1934713408
      %v572 = vunpack.c.0.s8 %v571
      %v573 = vlaneseq
      %v574 = vshrl.u32 %v573, 7
      %v575 = vsub.s32 %v572, %v574
      %v576 = vrot.slane %v562, %v575
      %v577 = vcombine.low %v545, %v560
      %v578 = vcombine.high %v545, %v560
      %v580 = vunpack.c.l.s4 1934713408
      %v581 = vunpack.c.0.s8 %v580
      %v582 = vlaneseq
      %v583 = vshrl.u32 %v582, 7
      %v584 = vsub.s32 %v581, %v583
      %v585 = vrot.slane %v577, %v584
      %v587 = vunpack.c.l.s4 1934713408
      %v588 = vunpack.c.0.s8 %v587
      %v589 = vlaneseq
      %v590 = vshrl.u32 %v589, 7
      %v591 = vsub.s32 %v588, %v590
      %v592 = vrot.slane %v578, %v591
      %v593 = vcombine.high %v569, 0.0
      %v594 = vcombine.high %v576, 0.0
      %v595 = vcombine.high %v585, 0.0
      %v596 = vcombine.high %v592, 0.0
      %598 = vrot.lane.b32.xlu0 %v526, 16
      %v599 = vpop.permute.xlu0 %598
      %602 = vrot.lane.b32.xlu0 %v509, 32
      %v603 = vpop.permute.xlu0 %602
      %606 = vrot.lane.b32.xlu0 %v527, 48
      %v607 = vpop.permute.xlu0 %606
      %610 = vrot.lane.b32.xlu0 %v518, 64
      %v611 = vpop.permute.xlu0 %610
      %614 = vrot.lane.b32.xlu0 %v528, 80
      %v615 = vpop.permute.xlu0 %614
      %618 = vrot.lane.b32.xlu0 %v525, 96
      %v619 = vpop.permute.xlu0 %618
      %622 = vrot.lane.b32.xlu0 %v529, 112
      %v623 = vpop.permute.xlu0 %622
      %626 = vrot.lane.b32.xlu0 %v593, 16
      %v627 = vpop.permute.xlu0 %626
      %630 = vrot.lane.b32.xlu0 %v576, 32
      %v631 = vpop.permute.xlu0 %630
      %634 = vrot.lane.b32.xlu0 %v594, 48
      %v635 = vpop.permute.xlu0 %634
      %638 = vrot.lane.b32.xlu0 %v585, 64
      %v639 = vpop.permute.xlu0 %638
      %642 = vrot.lane.b32.xlu0 %v595, 80
      %v643 = vpop.permute.xlu0 %642
      %646 = vrot.lane.b32.xlu0 %v592, 96
      %v647 = vpop.permute.xlu0 %646
      %650 = vrot.lane.b32.xlu0 %v596, 112
      %v651 = vpop.permute.xlu0 %650
      %v653 = vsel %vm418, %v502, %v599
      %v654 = vsel %vm420, %v653, %v603
      %v655 = vsel %vm422, %v654, %v607
      %v656 = vsel %vm424, %v655, %v611
      %v657 = vsel %vm426, %v656, %v615
      %v658 = vsel %vm428, %v657, %v619
      %v659 = vsel %vm430, %v658, %v623
      %v660 = vsel %vm418, %v569, %v627
      %v661 = vsel %vm420, %v660, %v631
      %v662 = vsel %vm422, %v661, %v635
      %v663 = vsel %vm424, %v662, %v639
      %v664 = vsel %vm426, %v663, %v643
      %v665 = vsel %vm428, %v664, %v647
      %v666 = vsel %vm430, %v665, %v651
      %667 = vrot.lane.b32.xlu0 %v219, 126
      %v668 = vpop.permute.xlu0 %667
      %669 = vrot.lane.b32.xlu0 %v220, 126
      %v670 = vpop.permute.xlu0 %669
      %671 = vrot.lane.b32.xlu0 %v222, 126
      %v672 = vpop.permute.xlu0 %671
      %673 = vrot.lane.b32.xlu0 %v223, 126
      %v674 = vpop.permute.xlu0 %673
      %675 = vrot.lane.b32.xlu0 %v225, 126
      %v676 = vpop.permute.xlu0 %675
      %677 = vrot.lane.b32.xlu0 %v226, 126
      %v678 = vpop.permute.xlu0 %677
      %v685 = vcombine.low %v668, %v676
      %v686 = vcombine.high %v668, %v676
      %v688 = vunpack.c.l.s4 1983009808
      %v689 = vunpack.c.0.s8 %v688
      %v690 = vlaneseq
      %v691 = vshrl.u32 %v690, 7
      %v692 = vsub.s32 %v689, %v691
      %v693 = vrot.slane %v685, %v692
      %v695 = vunpack.c.l.s4 1983009808
      %v696 = vunpack.c.0.s8 %v695
      %v697 = vlaneseq
      %v698 = vshrl.u32 %v697, 7
      %v699 = vsub.s32 %v696, %v698
      %v700 = vrot.slane %v686, %v699
      %v701 = vcombine.high %v672, 0.0
      %v703 = vunpack.c.l.s4 1983009808
      %v704 = vunpack.c.0.s8 %v703
      %v705 = vlaneseq
      %v706 = vshrl.u32 %v705, 7
      %v707 = vsub.s32 %v704, %v706
      %v708 = vrot.slane %v672, %v707
      %v710 = vunpack.c.l.s4 1983009808
      %v711 = vunpack.c.0.s8 %v710
      %v712 = vlaneseq
      %v713 = vshrl.u32 %v712, 7
      %v714 = vsub.s32 %v711, %v713
      %v715 = vrot.slane %v701, %v714
      %v716 = vcombine.low %v693, %v708
      %v717 = vcombine.high %v693, %v708
      %v719 = vunpack.c.l.s4 1934713408
      %v720 = vunpack.c.0.s8 %v719
      %v721 = vlaneseq
      %v722 = vshrl.u32 %v721, 7
      %v723 = vsub.s32 %v720, %v722
      %v724 = vrot.slane %v716, %v723
      %v726 = vunpack.c.l.s4 1934713408
      %v727 = vunpack.c.0.s8 %v726
      %v728 = vlaneseq
      %v729 = vshrl.u32 %v728, 7
      %v730 = vsub.s32 %v727, %v729
      %v731 = vrot.slane %v717, %v730
      %v732 = vcombine.low %v700, %v715
      %v733 = vcombine.high %v700, %v715
      %v735 = vunpack.c.l.s4 1934713408
      %v736 = vunpack.c.0.s8 %v735
      %v737 = vlaneseq
      %v738 = vshrl.u32 %v737, 7
      %v739 = vsub.s32 %v736, %v738
      %v740 = vrot.slane %v732, %v739
      %v742 = vunpack.c.l.s4 1934713408
      %v743 = vunpack.c.0.s8 %v742
      %v744 = vlaneseq
      %v745 = vshrl.u32 %v744, 7
      %v746 = vsub.s32 %v743, %v745
      %v747 = vrot.slane %v733, %v746
      %v748 = vcombine.high %v724, 0.0
      %v749 = vcombine.high %v731, 0.0
      %v750 = vcombine.high %v740, 0.0
      %v751 = vcombine.high %v747, 0.0
      %v752 = vcombine.low %v670, %v678
      %v753 = vcombine.high %v670, %v678
      %v755 = vunpack.c.l.s4 1983009808
      %v756 = vunpack.c.0.s8 %v755
      %v757 = vlaneseq
      %v758 = vshrl.u32 %v757, 7
      %v759 = vsub.s32 %v756, %v758
      %v760 = vrot.slane %v752, %v759
      %v762 = vunpack.c.l.s4 1983009808
      %v763 = vunpack.c.0.s8 %v762
      %v764 = vlaneseq
      %v765 = vshrl.u32 %v764, 7
      %v766 = vsub.s32 %v763, %v765
      %v767 = vrot.slane %v753, %v766
      %v768 = vcombine.high %v674, 0.0
      %v770 = vunpack.c.l.s4 1983009808
      %v771 = vunpack.c.0.s8 %v770
      %v772 = vlaneseq
      %v773 = vshrl.u32 %v772, 7
      %v774 = vsub.s32 %v771, %v773
      %v775 = vrot.slane %v674, %v774
      %v777 = vunpack.c.l.s4 1983009808
      %v778 = vunpack.c.0.s8 %v777
      %v779 = vlaneseq
      %v780 = vshrl.u32 %v779, 7
      %v781 = vsub.s32 %v778, %v780
      %v782 = vrot.slane %v768, %v781
      %v783 = vcombine.low %v760, %v775
      %v784 = vcombine.high %v760, %v775
      %v786 = vunpack.c.l.s4 1934713408
      %v787 = vunpack.c.0.s8 %v786
      %v788 = vlaneseq
      %v789 = vshrl.u32 %v788, 7
      %v790 = vsub.s32 %v787, %v789
      %v791 = vrot.slane %v783, %v790
      %v793 = vunpack.c.l.s4 1934713408
      %v794 = vunpack.c.0.s8 %v793
      %v795 = vlaneseq
      %v796 = vshrl.u32 %v795, 7
      %v797 = vsub.s32 %v794, %v796
      %v798 = vrot.slane %v784, %v797
      %v799 = vcombine.low %v767, %v782
      %v800 = vcombine.high %v767, %v782
      %v802 = vunpack.c.l.s4 1934713408
      %v803 = vunpack.c.0.s8 %v802
      %v804 = vlaneseq
      %v805 = vshrl.u32 %v804, 7
      %v806 = vsub.s32 %v803, %v805
      %v807 = vrot.slane %v799, %v806
      %v809 = vunpack.c.l.s4 1934713408
      %v810 = vunpack.c.0.s8 %v809
      %v811 = vlaneseq
      %v812 = vshrl.u32 %v811, 7
      %v813 = vsub.s32 %v810, %v812
      %v814 = vrot.slane %v800, %v813
      %v815 = vcombine.high %v791, 0.0
      %v816 = vcombine.high %v798, 0.0
      %v817 = vcombine.high %v807, 0.0
      %v818 = vcombine.high %v814, 0.0
      %820 = vrot.lane.b32.xlu0 %v748, 16
      %v821 = vpop.permute.xlu0 %820
      %824 = vrot.lane.b32.xlu0 %v731, 32
      %v825 = vpop.permute.xlu0 %824
      %828 = vrot.lane.b32.xlu0 %v749, 48
      %v829 = vpop.permute.xlu0 %828
      %832 = vrot.lane.b32.xlu0 %v740, 64
      %v833 = vpop.permute.xlu0 %832
      %836 = vrot.lane.b32.xlu0 %v750, 80
      %v837 = vpop.permute.xlu0 %836
      %840 = vrot.lane.b32.xlu0 %v747, 96
      %v841 = vpop.permute.xlu0 %840
      %844 = vrot.lane.b32.xlu0 %v751, 112
      %v845 = vpop.permute.xlu0 %844
      %848 = vrot.lane.b32.xlu0 %v815, 16
      %v849 = vpop.permute.xlu0 %848
      %852 = vrot.lane.b32.xlu0 %v798, 32
      %v853 = vpop.permute.xlu0 %852
      %856 = vrot.lane.b32.xlu0 %v816, 48
      %v857 = vpop.permute.xlu0 %856
      %860 = vrot.lane.b32.xlu0 %v807, 64
      %v861 = vpop.permute.xlu0 %860
      %864 = vrot.lane.b32.xlu0 %v817, 80
      %v865 = vpop.permute.xlu0 %864
      %868 = vrot.lane.b32.xlu0 %v814, 96
      %v869 = vpop.permute.xlu0 %868
      %872 = vrot.lane.b32.xlu0 %v818, 112
      %v873 = vpop.permute.xlu0 %872
      %v875 = vsel %vm418, %v724, %v821
      %v876 = vsel %vm420, %v875, %v825
      %v877 = vsel %vm422, %v876, %v829
      %v878 = vsel %vm424, %v877, %v833
      %v879 = vsel %vm426, %v878, %v837
      %v880 = vsel %vm428, %v879, %v841
      %v881 = vsel %vm430, %v880, %v845
      %v882 = vsel %vm418, %v791, %v849
      %v883 = vsel %vm420, %v882, %v853
      %v884 = vsel %vm422, %v883, %v857
      %v885 = vsel %vm424, %v884, %v861
      %v886 = vsel %vm426, %v885, %v865
      %v887 = vsel %vm428, %v886, %v869
      %v888 = vsel %vm430, %v887, %v873
      %vm892 = vcmask 1046528
      %v893 = vrot.slane %v219, 1
      %v894 = vrot.slane %v220, 1
      %v895 = vsel %vm892, %v893, %v894
      %v896 = vrot.slane %v221, 1
      %v897 = vsel %vm892, %v894, %v896
      %v898 = vrot.slane %v222, 1
      %v899 = vrot.slane %v223, 1
      %v900 = vsel %vm892, %v898, %v899
      %v901 = vrot.slane %v224, 1
      %v902 = vsel %vm892, %v899, %v901
      %v903 = vrot.slane %v225, 1
      %v904 = vrot.slane %v226, 1
      %v905 = vsel %vm892, %v903, %v904
      %v906 = vrot.slane %v227, 1
      %v907 = vsel %vm892, %v904, %v906
      %v914 = vcombine.low %v895, %v905
      %v915 = vcombine.high %v895, %v905
      %v917 = vunpack.c.l.s4 1983009808
      %v918 = vunpack.c.0.s8 %v917
      %v919 = vlaneseq
      %v920 = vshrl.u32 %v919, 7
      %v921 = vsub.s32 %v918, %v920
      %v922 = vrot.slane %v914, %v921
      %v924 = vunpack.c.l.s4 1983009808
      %v925 = vunpack.c.0.s8 %v924
      %v926 = vlaneseq
      %v927 = vshrl.u32 %v926, 7
      %v928 = vsub.s32 %v925, %v927
      %v929 = vrot.slane %v915, %v928
      %v930 = vcombine.high %v900, 0.0
      %v932 = vunpack.c.l.s4 1983009808
      %v933 = vunpack.c.0.s8 %v932
      %v934 = vlaneseq
      %v935 = vshrl.u32 %v934, 7
      %v936 = vsub.s32 %v933, %v935
      %v937 = vrot.slane %v900, %v936
      %v939 = vunpack.c.l.s4 1983009808
      %v940 = vunpack.c.0.s8 %v939
      %v941 = vlaneseq
      %v942 = vshrl.u32 %v941, 7
      %v943 = vsub.s32 %v940, %v942
      %v944 = vrot.slane %v930, %v943
      %v945 = vcombine.low %v922, %v937
      %v946 = vcombine.high %v922, %v937
      %v948 = vunpack.c.l.s4 1934713408
      %v949 = vunpack.c.0.s8 %v948
      %v950 = vlaneseq
      %v951 = vshrl.u32 %v950, 7
      %v952 = vsub.s32 %v949, %v951
      %v953 = vrot.slane %v945, %v952
      %v955 = vunpack.c.l.s4 1934713408
      %v956 = vunpack.c.0.s8 %v955
      %v957 = vlaneseq
      %v958 = vshrl.u32 %v957, 7
      %v959 = vsub.s32 %v956, %v958
      %v960 = vrot.slane %v946, %v959
      %v961 = vcombine.low %v929, %v944
      %v962 = vcombine.high %v929, %v944
      %v964 = vunpack.c.l.s4 1934713408
      %v965 = vunpack.c.0.s8 %v964
      %v966 = vlaneseq
      %v967 = vshrl.u32 %v966, 7
      %v968 = vsub.s32 %v965, %v967
      %v969 = vrot.slane %v961, %v968
      %v971 = vunpack.c.l.s4 1934713408
      %v972 = vunpack.c.0.s8 %v971
      %v973 = vlaneseq
      %v974 = vshrl.u32 %v973, 7
      %v975 = vsub.s32 %v972, %v974
      %v976 = vrot.slane %v962, %v975
      %v977 = vcombine.high %v953, 0.0
      %v978 = vcombine.high %v960, 0.0
      %v979 = vcombine.high %v969, 0.0
      %v980 = vcombine.high %v976, 0.0
      %v981 = vcombine.low %v897, %v907
      %v982 = vcombine.high %v897, %v907
      %v984 = vunpack.c.l.s4 1983009808
      %v985 = vunpack.c.0.s8 %v984
      %v986 = vlaneseq
      %v987 = vshrl.u32 %v986, 7
      %v988 = vsub.s32 %v985, %v987
      %v989 = vrot.slane %v981, %v988
      %v991 = vunpack.c.l.s4 1983009808
      %v992 = vunpack.c.0.s8 %v991
      %v993 = vlaneseq
      %v994 = vshrl.u32 %v993, 7
      %v995 = vsub.s32 %v992, %v994
      %v996 = vrot.slane %v982, %v995
      %v997 = vcombine.high %v902, 0.0
      %v999 = vunpack.c.l.s4 1983009808
      %v1000 = vunpack.c.0.s8 %v999
      %v1001 = vlaneseq
      %v1002 = vshrl.u32 %v1001, 7
      %v1003 = vsub.s32 %v1000, %v1002
      %v1004 = vrot.slane %v902, %v1003
      %v1006 = vunpack.c.l.s4 1983009808
      %v1007 = vunpack.c.0.s8 %v1006
      %v1008 = vlaneseq
      %v1009 = vshrl.u32 %v1008, 7
      %v1010 = vsub.s32 %v1007, %v1009
      %v1011 = vrot.slane %v997, %v1010
      %v1012 = vcombine.low %v989, %v1004
      %v1013 = vcombine.high %v989, %v1004
      %v1015 = vunpack.c.l.s4 1934713408
      %v1016 = vunpack.c.0.s8 %v1015
      %v1017 = vlaneseq
      %v1018 = vshrl.u32 %v1017, 7
      %v1019 = vsub.s32 %v1016, %v1018
      %v1020 = vrot.slane %v1012, %v1019
      %v1022 = vunpack.c.l.s4 1934713408
      %v1023 = vunpack.c.0.s8 %v1022
      %v1024 = vlaneseq
      %v1025 = vshrl.u32 %v1024, 7
      %v1026 = vsub.s32 %v1023, %v1025
      %v1027 = vrot.slane %v1013, %v1026
      %v1028 = vcombine.low %v996, %v1011
      %v1029 = vcombine.high %v996, %v1011
      %v1031 = vunpack.c.l.s4 1934713408
      %v1032 = vunpack.c.0.s8 %v1031
      %v1033 = vlaneseq
      %v1034 = vshrl.u32 %v1033, 7
      %v1035 = vsub.s32 %v1032, %v1034
      %v1036 = vrot.slane %v1028, %v1035
      %v1038 = vunpack.c.l.s4 1934713408
      %v1039 = vunpack.c.0.s8 %v1038
      %v1040 = vlaneseq
      %v1041 = vshrl.u32 %v1040, 7
      %v1042 = vsub.s32 %v1039, %v1041
      %v1043 = vrot.slane %v1029, %v1042
      %v1044 = vcombine.high %v1020, 0.0
      %v1045 = vcombine.high %v1027, 0.0
      %v1046 = vcombine.high %v1036, 0.0
      %v1047 = vcombine.high %v1043, 0.0
      %1049 = vrot.lane.b32.xlu0 %v977, 16
      %v1050 = vpop.permute.xlu0 %1049
      %1053 = vrot.lane.b32.xlu0 %v960, 32
      %v1054 = vpop.permute.xlu0 %1053
      %1057 = vrot.lane.b32.xlu0 %v978, 48
      %v1058 = vpop.permute.xlu0 %1057
      %1061 = vrot.lane.b32.xlu0 %v969, 64
      %v1062 = vpop.permute.xlu0 %1061
      %1065 = vrot.lane.b32.xlu0 %v979, 80
      %v1066 = vpop.permute.xlu0 %1065
      %1069 = vrot.lane.b32.xlu0 %v976, 96
      %v1070 = vpop.permute.xlu0 %1069
      %1073 = vrot.lane.b32.xlu0 %v980, 112
      %v1074 = vpop.permute.xlu0 %1073
      %1077 = vrot.lane.b32.xlu0 %v1044, 16
      %v1078 = vpop.permute.xlu0 %1077
      %1081 = vrot.lane.b32.xlu0 %v1027, 32
      %v1082 = vpop.permute.xlu0 %1081
      %1085 = vrot.lane.b32.xlu0 %v1045, 48
      %v1086 = vpop.permute.xlu0 %1085
      %1089 = vrot.lane.b32.xlu0 %v1036, 64
      %v1090 = vpop.permute.xlu0 %1089
      %1093 = vrot.lane.b32.xlu0 %v1046, 80
      %v1094 = vpop.permute.xlu0 %1093
      %1097 = vrot.lane.b32.xlu0 %v1043, 96
      %v1098 = vpop.permute.xlu0 %1097
      %1101 = vrot.lane.b32.xlu0 %v1047, 112
      %v1102 = vpop.permute.xlu0 %1101
      %v1104 = vsel %vm418, %v953, %v1050
      %v1105 = vsel %vm420, %v1104, %v1054
      %v1106 = vsel %vm422, %v1105, %v1058
      %v1107 = vsel %vm424, %v1106, %v1062
      %v1108 = vsel %vm426, %v1107, %v1066
      %v1109 = vsel %vm428, %v1108, %v1070
      %v1110 = vsel %vm430, %v1109, %v1074
      %v1111 = vsel %vm418, %v1020, %v1078
      %v1112 = vsel %vm420, %v1111, %v1082
      %v1113 = vsel %vm422, %v1112, %v1086
      %v1114 = vsel %vm424, %v1113, %v1090
      %v1115 = vsel %vm426, %v1114, %v1094
      %v1116 = vsel %vm428, %v1115, %v1098
      %v1117 = vsel %vm430, %v1116, %v1102
      %1118 = vrot.lane.b32.xlu0 %v895, 127
      %v1119 = vpop.permute.xlu0 %1118
      %1120 = vrot.lane.b32.xlu0 %v897, 127
      %v1121 = vpop.permute.xlu0 %1120
      %1122 = vrot.lane.b32.xlu0 %v900, 127
      %v1123 = vpop.permute.xlu0 %1122
      %1124 = vrot.lane.b32.xlu0 %v902, 127
      %v1125 = vpop.permute.xlu0 %1124
      %1126 = vrot.lane.b32.xlu0 %v905, 127
      %v1127 = vpop.permute.xlu0 %1126
      %1128 = vrot.lane.b32.xlu0 %v907, 127
      %v1129 = vpop.permute.xlu0 %1128
      %v1136 = vcombine.low %v1119, %v1127
      %v1137 = vcombine.high %v1119, %v1127
      %v1139 = vunpack.c.l.s4 1983009808
      %v1140 = vunpack.c.0.s8 %v1139
      %v1141 = vlaneseq
      %v1142 = vshrl.u32 %v1141, 7
      %v1143 = vsub.s32 %v1140, %v1142
      %v1144 = vrot.slane %v1136, %v1143
      %v1146 = vunpack.c.l.s4 1983009808
      %v1147 = vunpack.c.0.s8 %v1146
      %v1148 = vlaneseq
      %v1149 = vshrl.u32 %v1148, 7
      %v1150 = vsub.s32 %v1147, %v1149
      %v1151 = vrot.slane %v1137, %v1150
      %v1152 = vcombine.high %v1123, 0.0
      %v1154 = vunpack.c.l.s4 1983009808
      %v1155 = vunpack.c.0.s8 %v1154
      %v1156 = vlaneseq
      %v1157 = vshrl.u32 %v1156, 7
      %v1158 = vsub.s32 %v1155, %v1157
      %v1159 = vrot.slane %v1123, %v1158
      %v1161 = vunpack.c.l.s4 1983009808
      %v1162 = vunpack.c.0.s8 %v1161
      %v1163 = vlaneseq
      %v1164 = vshrl.u32 %v1163, 7
      %v1165 = vsub.s32 %v1162, %v1164
      %v1166 = vrot.slane %v1152, %v1165
      %v1167 = vcombine.low %v1144, %v1159
      %v1168 = vcombine.high %v1144, %v1159
      %v1170 = vunpack.c.l.s4 1934713408
      %v1171 = vunpack.c.0.s8 %v1170
      %v1172 = vlaneseq
      %v1173 = vshrl.u32 %v1172, 7
      %v1174 = vsub.s32 %v1171, %v1173
      %v1175 = vrot.slane %v1167, %v1174
      %v1177 = vunpack.c.l.s4 1934713408
      %v1178 = vunpack.c.0.s8 %v1177
      %v1179 = vlaneseq
      %v1180 = vshrl.u32 %v1179, 7
      %v1181 = vsub.s32 %v1178, %v1180
      %v1182 = vrot.slane %v1168, %v1181
      %v1183 = vcombine.low %v1151, %v1166
      %v1184 = vcombine.high %v1151, %v1166
      %v1186 = vunpack.c.l.s4 1934713408
      %v1187 = vunpack.c.0.s8 %v1186
      %v1188 = vlaneseq
      %v1189 = vshrl.u32 %v1188, 7
      %v1190 = vsub.s32 %v1187, %v1189
      %v1191 = vrot.slane %v1183, %v1190
      %v1193 = vunpack.c.l.s4 1934713408
      %v1194 = vunpack.c.0.s8 %v1193
      %v1195 = vlaneseq
      %v1196 = vshrl.u32 %v1195, 7
      %v1197 = vsub.s32 %v1194, %v1196
      %v1198 = vrot.slane %v1184, %v1197
      %v1199 = vcombine.high %v1175, 0.0
      %v1200 = vcombine.high %v1182, 0.0
      %v1201 = vcombine.high %v1191, 0.0
      %v1202 = vcombine.high %v1198, 0.0
      %v1203 = vcombine.low %v1121, %v1129
      %v1204 = vcombine.high %v1121, %v1129
      %v1206 = vunpack.c.l.s4 1983009808
      %v1207 = vunpack.c.0.s8 %v1206
      %v1208 = vlaneseq
      %v1209 = vshrl.u32 %v1208, 7
      %v1210 = vsub.s32 %v1207, %v1209
      %v1211 = vrot.slane %v1203, %v1210
      %v1213 = vunpack.c.l.s4 1983009808
      %v1214 = vunpack.c.0.s8 %v1213
      %v1215 = vlaneseq
      %v1216 = vshrl.u32 %v1215, 7
      %v1217 = vsub.s32 %v1214, %v1216
      %v1218 = vrot.slane %v1204, %v1217
      %v1219 = vcombine.high %v1125, 0.0
      %v1221 = vunpack.c.l.s4 1983009808
      %v1222 = vunpack.c.0.s8 %v1221
      %v1223 = vlaneseq
      %v1224 = vshrl.u32 %v1223, 7
      %v1225 = vsub.s32 %v1222, %v1224
      %v1226 = vrot.slane %v1125, %v1225
      %v1228 = vunpack.c.l.s4 1983009808
      %v1229 = vunpack.c.0.s8 %v1228
      %v1230 = vlaneseq
      %v1231 = vshrl.u32 %v1230, 7
      %v1232 = vsub.s32 %v1229, %v1231
      %v1233 = vrot.slane %v1219, %v1232
      %v1234 = vcombine.low %v1211, %v1226
      %v1235 = vcombine.high %v1211, %v1226
      %v1237 = vunpack.c.l.s4 1934713408
      %v1238 = vunpack.c.0.s8 %v1237
      %v1239 = vlaneseq
      %v1240 = vshrl.u32 %v1239, 7
      %v1241 = vsub.s32 %v1238, %v1240
      %v1242 = vrot.slane %v1234, %v1241
      %v1244 = vunpack.c.l.s4 1934713408
      %v1245 = vunpack.c.0.s8 %v1244
      %v1246 = vlaneseq
      %v1247 = vshrl.u32 %v1246, 7
      %v1248 = vsub.s32 %v1245, %v1247
      %v1249 = vrot.slane %v1235, %v1248
      %v1250 = vcombine.low %v1218, %v1233
      %v1251 = vcombine.high %v1218, %v1233
      %v1253 = vunpack.c.l.s4 1934713408
      %v1254 = vunpack.c.0.s8 %v1253
      %v1255 = vlaneseq
      %v1256 = vshrl.u32 %v1255, 7
      %v1257 = vsub.s32 %v1254, %v1256
      %v1258 = vrot.slane %v1250, %v1257
      %v1260 = vunpack.c.l.s4 1934713408
      %v1261 = vunpack.c.0.s8 %v1260
      %v1262 = vlaneseq
      %v1263 = vshrl.u32 %v1262, 7
      %v1264 = vsub.s32 %v1261, %v1263
      %v1265 = vrot.slane %v1251, %v1264
      %v1266 = vcombine.high %v1242, 0.0
      %v1267 = vcombine.high %v1249, 0.0
      %v1268 = vcombine.high %v1258, 0.0
      %v1269 = vcombine.high %v1265, 0.0
      %1271 = vrot.lane.b32.xlu0 %v1199, 16
      %v1272 = vpop.permute.xlu0 %1271
      %1275 = vrot.lane.b32.xlu0 %v1182, 32
      %v1276 = vpop.permute.xlu0 %1275
      %1279 = vrot.lane.b32.xlu0 %v1200, 48
      %v1280 = vpop.permute.xlu0 %1279
      %1283 = vrot.lane.b32.xlu0 %v1191, 64
      %v1284 = vpop.permute.xlu0 %1283
      %1287 = vrot.lane.b32.xlu0 %v1201, 80
      %v1288 = vpop.permute.xlu0 %1287
      %1291 = vrot.lane.b32.xlu0 %v1198, 96
      %v1292 = vpop.permute.xlu0 %1291
      %1295 = vrot.lane.b32.xlu0 %v1202, 112
      %v1296 = vpop.permute.xlu0 %1295
      %1299 = vrot.lane.b32.xlu0 %v1266, 16
      %v1300 = vpop.permute.xlu0 %1299
      %1303 = vrot.lane.b32.xlu0 %v1249, 32
      %v1304 = vpop.permute.xlu0 %1303
      %1307 = vrot.lane.b32.xlu0 %v1267, 48
      %v1308 = vpop.permute.xlu0 %1307
      %1311 = vrot.lane.b32.xlu0 %v1258, 64
      %v1312 = vpop.permute.xlu0 %1311
      %1315 = vrot.lane.b32.xlu0 %v1268, 80
      %v1316 = vpop.permute.xlu0 %1315
      %1319 = vrot.lane.b32.xlu0 %v1265, 96
      %v1320 = vpop.permute.xlu0 %1319
      %1323 = vrot.lane.b32.xlu0 %v1269, 112
      %v1324 = vpop.permute.xlu0 %1323
      %v1326 = vsel %vm418, %v1175, %v1272
      %v1327 = vsel %vm420, %v1326, %v1276
      %v1328 = vsel %vm422, %v1327, %v1280
      %v1329 = vsel %vm424, %v1328, %v1284
      %v1330 = vsel %vm426, %v1329, %v1288
      %v1331 = vsel %vm428, %v1330, %v1292
      %v1332 = vsel %vm430, %v1331, %v1296
      %v1333 = vsel %vm418, %v1242, %v1300
      %v1334 = vsel %vm420, %v1333, %v1304
      %v1335 = vsel %vm422, %v1334, %v1308
      %v1336 = vsel %vm424, %v1335, %v1312
      %v1337 = vsel %vm426, %v1336, %v1316
      %v1338 = vsel %vm428, %v1337, %v1320
      %v1339 = vsel %vm430, %v1338, %v1324
      %1340 = vrot.lane.b32.xlu0 %v895, 126
      %v1341 = vpop.permute.xlu0 %1340
      %1342 = vrot.lane.b32.xlu0 %v897, 126
      %v1343 = vpop.permute.xlu0 %1342
      %1344 = vrot.lane.b32.xlu0 %v900, 126
      %v1345 = vpop.permute.xlu0 %1344
      %1346 = vrot.lane.b32.xlu0 %v902, 126
      %v1347 = vpop.permute.xlu0 %1346
      %1348 = vrot.lane.b32.xlu0 %v905, 126
      %v1349 = vpop.permute.xlu0 %1348
      %1350 = vrot.lane.b32.xlu0 %v907, 126
      %v1351 = vpop.permute.xlu0 %1350
      %v1358 = vcombine.low %v1341, %v1349
      %v1359 = vcombine.high %v1341, %v1349
      %v1361 = vunpack.c.l.s4 1983009808
      %v1362 = vunpack.c.0.s8 %v1361
      %v1363 = vlaneseq
      %v1364 = vshrl.u32 %v1363, 7
      %v1365 = vsub.s32 %v1362, %v1364
      %v1366 = vrot.slane %v1358, %v1365
      %v1368 = vunpack.c.l.s4 1983009808
      %v1369 = vunpack.c.0.s8 %v1368
      %v1370 = vlaneseq
      %v1371 = vshrl.u32 %v1370, 7
      %v1372 = vsub.s32 %v1369, %v1371
      %v1373 = vrot.slane %v1359, %v1372
      %v1374 = vcombine.high %v1345, 0.0
      %v1376 = vunpack.c.l.s4 1983009808
      %v1377 = vunpack.c.0.s8 %v1376
      %v1378 = vlaneseq
      %v1379 = vshrl.u32 %v1378, 7
      %v1380 = vsub.s32 %v1377, %v1379
      %v1381 = vrot.slane %v1345, %v1380
      %v1383 = vunpack.c.l.s4 1983009808
      %v1384 = vunpack.c.0.s8 %v1383
      %v1385 = vlaneseq
      %v1386 = vshrl.u32 %v1385, 7
      %v1387 = vsub.s32 %v1384, %v1386
      %v1388 = vrot.slane %v1374, %v1387
      %v1389 = vcombine.low %v1366, %v1381
      %v1390 = vcombine.high %v1366, %v1381
      %v1392 = vunpack.c.l.s4 1934713408
      %v1393 = vunpack.c.0.s8 %v1392
      %v1394 = vlaneseq
      %v1395 = vshrl.u32 %v1394, 7
      %v1396 = vsub.s32 %v1393, %v1395
      %v1397 = vrot.slane %v1389, %v1396
      %v1399 = vunpack.c.l.s4 1934713408
      %v1400 = vunpack.c.0.s8 %v1399
      %v1401 = vlaneseq
      %v1402 = vshrl.u32 %v1401, 7
      %v1403 = vsub.s32 %v1400, %v1402
      %v1404 = vrot.slane %v1390, %v1403
      %v1405 = vcombine.low %v1373, %v1388
      %v1406 = vcombine.high %v1373, %v1388
      %v1408 = vunpack.c.l.s4 1934713408
      %v1409 = vunpack.c.0.s8 %v1408
      %v1410 = vlaneseq
      %v1411 = vshrl.u32 %v1410, 7
      %v1412 = vsub.s32 %v1409, %v1411
      %v1413 = vrot.slane %v1405, %v1412
      %v1415 = vunpack.c.l.s4 1934713408
      %v1416 = vunpack.c.0.s8 %v1415
      %v1417 = vlaneseq
      %v1418 = vshrl.u32 %v1417, 7
      %v1419 = vsub.s32 %v1416, %v1418
      %v1420 = vrot.slane %v1406, %v1419
      %v1421 = vcombine.high %v1397, 0.0
      %v1422 = vcombine.high %v1404, 0.0
      %v1423 = vcombine.high %v1413, 0.0
      %v1424 = vcombine.high %v1420, 0.0
      %v1425 = vcombine.low %v1343, %v1351
      %v1426 = vcombine.high %v1343, %v1351
      %v1428 = vunpack.c.l.s4 1983009808
      %v1429 = vunpack.c.0.s8 %v1428
      %v1430 = vlaneseq
      %v1431 = vshrl.u32 %v1430, 7
      %v1432 = vsub.s32 %v1429, %v1431
      %v1433 = vrot.slane %v1425, %v1432
      %v1435 = vunpack.c.l.s4 1983009808
      %v1436 = vunpack.c.0.s8 %v1435
      %v1437 = vlaneseq
      %v1438 = vshrl.u32 %v1437, 7
      %v1439 = vsub.s32 %v1436, %v1438
      %v1440 = vrot.slane %v1426, %v1439
      %v1441 = vcombine.high %v1347, 0.0
      %v1443 = vunpack.c.l.s4 1983009808
      %v1444 = vunpack.c.0.s8 %v1443
      %v1445 = vlaneseq
      %v1446 = vshrl.u32 %v1445, 7
      %v1447 = vsub.s32 %v1444, %v1446
      %v1448 = vrot.slane %v1347, %v1447
      %v1450 = vunpack.c.l.s4 1983009808
      %v1451 = vunpack.c.0.s8 %v1450
      %v1452 = vlaneseq
      %v1453 = vshrl.u32 %v1452, 7
      %v1454 = vsub.s32 %v1451, %v1453
      %v1455 = vrot.slane %v1441, %v1454
      %v1456 = vcombine.low %v1433, %v1448
      %v1457 = vcombine.high %v1433, %v1448
      %v1459 = vunpack.c.l.s4 1934713408
      %v1460 = vunpack.c.0.s8 %v1459
      %v1461 = vlaneseq
      %v1462 = vshrl.u32 %v1461, 7
      %v1463 = vsub.s32 %v1460, %v1462
      %v1464 = vrot.slane %v1456, %v1463
      %v1466 = vunpack.c.l.s4 1934713408
      %v1467 = vunpack.c.0.s8 %v1466
      %v1468 = vlaneseq
      %v1469 = vshrl.u32 %v1468, 7
      %v1470 = vsub.s32 %v1467, %v1469
      %v1471 = vrot.slane %v1457, %v1470
      %v1472 = vcombine.low %v1440, %v1455
      %v1473 = vcombine.high %v1440, %v1455
      %v1475 = vunpack.c.l.s4 1934713408
      %v1476 = vunpack.c.0.s8 %v1475
      %v1477 = vlaneseq
      %v1478 = vshrl.u32 %v1477, 7
      %v1479 = vsub.s32 %v1476, %v1478
      %v1480 = vrot.slane %v1472, %v1479
      %v1482 = vunpack.c.l.s4 1934713408
      %v1483 = vunpack.c.0.s8 %v1482
      %v1484 = vlaneseq
      %v1485 = vshrl.u32 %v1484, 7
      %v1486 = vsub.s32 %v1483, %v1485
      %v1487 = vrot.slane %v1473, %v1486
      %v1488 = vcombine.high %v1464, 0.0
      %v1489 = vcombine.high %v1471, 0.0
      %v1490 = vcombine.high %v1480, 0.0
      %v1491 = vcombine.high %v1487, 0.0
      %1493 = vrot.lane.b32.xlu0 %v1421, 16
      %v1494 = vpop.permute.xlu0 %1493
      %1497 = vrot.lane.b32.xlu0 %v1404, 32
      %v1498 = vpop.permute.xlu0 %1497
      %1501 = vrot.lane.b32.xlu0 %v1422, 48
      %v1502 = vpop.permute.xlu0 %1501
      %1505 = vrot.lane.b32.xlu0 %v1413, 64
      %v1506 = vpop.permute.xlu0 %1505
      %1509 = vrot.lane.b32.xlu0 %v1423, 80
      %v1510 = vpop.permute.xlu0 %1509
      %1513 = vrot.lane.b32.xlu0 %v1420, 96
      %v1514 = vpop.permute.xlu0 %1513
      %1517 = vrot.lane.b32.xlu0 %v1424, 112
      %v1518 = vpop.permute.xlu0 %1517
      %1521 = vrot.lane.b32.xlu0 %v1488, 16
      %v1522 = vpop.permute.xlu0 %1521
      %1525 = vrot.lane.b32.xlu0 %v1471, 32
      %v1526 = vpop.permute.xlu0 %1525
      %1529 = vrot.lane.b32.xlu0 %v1489, 48
      %v1530 = vpop.permute.xlu0 %1529
      %1533 = vrot.lane.b32.xlu0 %v1480, 64
      %v1534 = vpop.permute.xlu0 %1533
      %1537 = vrot.lane.b32.xlu0 %v1490, 80
      %v1538 = vpop.permute.xlu0 %1537
      %1541 = vrot.lane.b32.xlu0 %v1487, 96
      %v1542 = vpop.permute.xlu0 %1541
      %1545 = vrot.lane.b32.xlu0 %v1491, 112
      %v1546 = vpop.permute.xlu0 %1545
      %v1548 = vsel %vm418, %v1397, %v1494
      %v1549 = vsel %vm420, %v1548, %v1498
      %v1550 = vsel %vm422, %v1549, %v1502
      %v1551 = vsel %vm424, %v1550, %v1506
      %v1552 = vsel %vm426, %v1551, %v1510
      %v1553 = vsel %vm428, %v1552, %v1514
      %v1554 = vsel %vm430, %v1553, %v1518
      %v1555 = vsel %vm418, %v1464, %v1522
      %v1556 = vsel %vm420, %v1555, %v1526
      %v1557 = vsel %vm422, %v1556, %v1530
      %v1558 = vsel %vm424, %v1557, %v1534
      %v1559 = vsel %vm426, %v1558, %v1538
      %v1560 = vsel %vm428, %v1559, %v1542
      %v1561 = vsel %vm430, %v1560, %v1546
      %vm1562 = vcmask 1045504
      %v1563 = vrot.slane %v219, 2
      %v1564 = vrot.slane %v220, 2
      %v1565 = vsel %vm1562, %v1563, %v1564
      %v1566 = vrot.slane %v221, 2
      %v1567 = vsel %vm1562, %v1564, %v1566
      %v1568 = vrot.slane %v222, 2
      %v1569 = vrot.slane %v223, 2
      %v1570 = vsel %vm1562, %v1568, %v1569
      %v1571 = vrot.slane %v224, 2
      %v1572 = vsel %vm1562, %v1569, %v1571
      %v1573 = vrot.slane %v225, 2
      %v1574 = vrot.slane %v226, 2
      %v1575 = vsel %vm1562, %v1573, %v1574
      %v1576 = vrot.slane %v227, 2
      %v1577 = vsel %vm1562, %v1574, %v1576
      %v1584 = vcombine.low %v1565, %v1575
      %v1585 = vcombine.high %v1565, %v1575
      %v1587 = vunpack.c.l.s4 1983009808
      %v1588 = vunpack.c.0.s8 %v1587
      %v1589 = vlaneseq
      %v1590 = vshrl.u32 %v1589, 7
      %v1591 = vsub.s32 %v1588, %v1590
      %v1592 = vrot.slane %v1584, %v1591
      %v1594 = vunpack.c.l.s4 1983009808
      %v1595 = vunpack.c.0.s8 %v1594
      %v1596 = vlaneseq
      %v1597 = vshrl.u32 %v1596, 7
      %v1598 = vsub.s32 %v1595, %v1597
      %v1599 = vrot.slane %v1585, %v1598
      %v1600 = vcombine.high %v1570, 0.0
      %v1602 = vunpack.c.l.s4 1983009808
      %v1603 = vunpack.c.0.s8 %v1602
      %v1604 = vlaneseq
      %v1605 = vshrl.u32 %v1604, 7
      %v1606 = vsub.s32 %v1603, %v1605
      %v1607 = vrot.slane %v1570, %v1606
      %v1609 = vunpack.c.l.s4 1983009808
      %v1610 = vunpack.c.0.s8 %v1609
      %v1611 = vlaneseq
      %v1612 = vshrl.u32 %v1611, 7
      %v1613 = vsub.s32 %v1610, %v1612
      %v1614 = vrot.slane %v1600, %v1613
      %v1615 = vcombine.low %v1592, %v1607
      %v1616 = vcombine.high %v1592, %v1607
      %v1618 = vunpack.c.l.s4 1934713408
      %v1619 = vunpack.c.0.s8 %v1618
      %v1620 = vlaneseq
      %v1621 = vshrl.u32 %v1620, 7
      %v1622 = vsub.s32 %v1619, %v1621
      %v1623 = vrot.slane %v1615, %v1622
      %v1625 = vunpack.c.l.s4 1934713408
      %v1626 = vunpack.c.0.s8 %v1625
      %v1627 = vlaneseq
      %v1628 = vshrl.u32 %v1627, 7
      %v1629 = vsub.s32 %v1626, %v1628
      %v1630 = vrot.slane %v1616, %v1629
      %v1631 = vcombine.low %v1599, %v1614
      %v1632 = vcombine.high %v1599, %v1614
      %v1634 = vunpack.c.l.s4 1934713408
      %v1635 = vunpack.c.0.s8 %v1634
      %v1636 = vlaneseq
      %v1637 = vshrl.u32 %v1636, 7
      %v1638 = vsub.s32 %v1635, %v1637
      %v1639 = vrot.slane %v1631, %v1638
      %v1641 = vunpack.c.l.s4 1934713408
      %v1642 = vunpack.c.0.s8 %v1641
      %v1643 = vlaneseq
      %v1644 = vshrl.u32 %v1643, 7
      %v1645 = vsub.s32 %v1642, %v1644
      %v1646 = vrot.slane %v1632, %v1645
      %v1647 = vcombine.high %v1623, 0.0
      %v1648 = vcombine.high %v1630, 0.0
      %v1649 = vcombine.high %v1639, 0.0
      %v1650 = vcombine.high %v1646, 0.0
      %v1651 = vcombine.low %v1567, %v1577
      %v1652 = vcombine.high %v1567, %v1577
      %v1654 = vunpack.c.l.s4 1983009808
      %v1655 = vunpack.c.0.s8 %v1654
      %v1656 = vlaneseq
      %v1657 = vshrl.u32 %v1656, 7
      %v1658 = vsub.s32 %v1655, %v1657
      %v1659 = vrot.slane %v1651, %v1658
      %v1661 = vunpack.c.l.s4 1983009808
      %v1662 = vunpack.c.0.s8 %v1661
      %v1663 = vlaneseq
      %v1664 = vshrl.u32 %v1663, 7
      %v1665 = vsub.s32 %v1662, %v1664
      %v1666 = vrot.slane %v1652, %v1665
      %v1667 = vcombine.high %v1572, 0.0
      %v1669 = vunpack.c.l.s4 1983009808
      %v1670 = vunpack.c.0.s8 %v1669
      %v1671 = vlaneseq
      %v1672 = vshrl.u32 %v1671, 7
      %v1673 = vsub.s32 %v1670, %v1672
      %v1674 = vrot.slane %v1572, %v1673
      %v1676 = vunpack.c.l.s4 1983009808
      %v1677 = vunpack.c.0.s8 %v1676
      %v1678 = vlaneseq
      %v1679 = vshrl.u32 %v1678, 7
      %v1680 = vsub.s32 %v1677, %v1679
      %v1681 = vrot.slane %v1667, %v1680
      %v1682 = vcombine.low %v1659, %v1674
      %v1683 = vcombine.high %v1659, %v1674
      %v1685 = vunpack.c.l.s4 1934713408
      %v1686 = vunpack.c.0.s8 %v1685
      %v1687 = vlaneseq
      %v1688 = vshrl.u32 %v1687, 7
      %v1689 = vsub.s32 %v1686, %v1688
      %v1690 = vrot.slane %v1682, %v1689
      %v1692 = vunpack.c.l.s4 1934713408
      %v1693 = vunpack.c.0.s8 %v1692
      %v1694 = vlaneseq
      %v1695 = vshrl.u32 %v1694, 7
      %v1696 = vsub.s32 %v1693, %v1695
      %v1697 = vrot.slane %v1683, %v1696
      %v1698 = vcombine.low %v1666, %v1681
      %v1699 = vcombine.high %v1666, %v1681
      %v1701 = vunpack.c.l.s4 1934713408
      %v1702 = vunpack.c.0.s8 %v1701
      %v1703 = vlaneseq
      %v1704 = vshrl.u32 %v1703, 7
      %v1705 = vsub.s32 %v1702, %v1704
      %v1706 = vrot.slane %v1698, %v1705
      %v1708 = vunpack.c.l.s4 1934713408
      %v1709 = vunpack.c.0.s8 %v1708
      %v1710 = vlaneseq
      %v1711 = vshrl.u32 %v1710, 7
      %v1712 = vsub.s32 %v1709, %v1711
      %v1713 = vrot.slane %v1699, %v1712
      %v1714 = vcombine.high %v1690, 0.0
      %v1715 = vcombine.high %v1697, 0.0
      %v1716 = vcombine.high %v1706, 0.0
      %v1717 = vcombine.high %v1713, 0.0
      %1719 = vrot.lane.b32.xlu0 %v1647, 16
      %v1720 = vpop.permute.xlu0 %1719
      %1723 = vrot.lane.b32.xlu0 %v1630, 32
      %v1724 = vpop.permute.xlu0 %1723
      %1727 = vrot.lane.b32.xlu0 %v1648, 48
      %v1728 = vpop.permute.xlu0 %1727
      %1731 = vrot.lane.b32.xlu0 %v1639, 64
      %v1732 = vpop.permute.xlu0 %1731
      %1735 = vrot.lane.b32.xlu0 %v1649, 80
      %v1736 = vpop.permute.xlu0 %1735
      %1739 = vrot.lane.b32.xlu0 %v1646, 96
      %v1740 = vpop.permute.xlu0 %1739
      %1743 = vrot.lane.b32.xlu0 %v1650, 112
      %v1744 = vpop.permute.xlu0 %1743
      %1747 = vrot.lane.b32.xlu0 %v1714, 16
      %v1748 = vpop.permute.xlu0 %1747
      %1751 = vrot.lane.b32.xlu0 %v1697, 32
      %v1752 = vpop.permute.xlu0 %1751
      %1755 = vrot.lane.b32.xlu0 %v1715, 48
      %v1756 = vpop.permute.xlu0 %1755
      %1759 = vrot.lane.b32.xlu0 %v1706, 64
      %v1760 = vpop.permute.xlu0 %1759
      %1763 = vrot.lane.b32.xlu0 %v1716, 80
      %v1764 = vpop.permute.xlu0 %1763
      %1767 = vrot.lane.b32.xlu0 %v1713, 96
      %v1768 = vpop.permute.xlu0 %1767
      %1771 = vrot.lane.b32.xlu0 %v1717, 112
      %v1772 = vpop.permute.xlu0 %1771
      %v1774 = vsel %vm418, %v1623, %v1720
      %v1775 = vsel %vm420, %v1774, %v1724
      %v1776 = vsel %vm422, %v1775, %v1728
      %v1777 = vsel %vm424, %v1776, %v1732
      %v1778 = vsel %vm426, %v1777, %v1736
      %v1779 = vsel %vm428, %v1778, %v1740
      %v1780 = vsel %vm430, %v1779, %v1744
      %v1781 = vsel %vm418, %v1690, %v1748
      %v1782 = vsel %vm420, %v1781, %v1752
      %v1783 = vsel %vm422, %v1782, %v1756
      %v1784 = vsel %vm424, %v1783, %v1760
      %v1785 = vsel %vm426, %v1784, %v1764
      %v1786 = vsel %vm428, %v1785, %v1768
      %v1787 = vsel %vm430, %v1786, %v1772
      %1788 = vrot.lane.b32.xlu0 %v1565, 127
      %v1789 = vpop.permute.xlu0 %1788
      %1790 = vrot.lane.b32.xlu0 %v1567, 127
      %v1791 = vpop.permute.xlu0 %1790
      %1792 = vrot.lane.b32.xlu0 %v1570, 127
      %v1793 = vpop.permute.xlu0 %1792
      %1794 = vrot.lane.b32.xlu0 %v1572, 127
      %v1795 = vpop.permute.xlu0 %1794
      %1796 = vrot.lane.b32.xlu0 %v1575, 127
      %v1797 = vpop.permute.xlu0 %1796
      %1798 = vrot.lane.b32.xlu0 %v1577, 127
      %v1799 = vpop.permute.xlu0 %1798
      %v1806 = vcombine.low %v1789, %v1797
      %v1807 = vcombine.high %v1789, %v1797
      %v1809 = vunpack.c.l.s4 1983009808
      %v1810 = vunpack.c.0.s8 %v1809
      %v1811 = vlaneseq
      %v1812 = vshrl.u32 %v1811, 7
      %v1813 = vsub.s32 %v1810, %v1812
      %v1814 = vrot.slane %v1806, %v1813
      %v1816 = vunpack.c.l.s4 1983009808
      %v1817 = vunpack.c.0.s8 %v1816
      %v1818 = vlaneseq
      %v1819 = vshrl.u32 %v1818, 7
      %v1820 = vsub.s32 %v1817, %v1819
      %v1821 = vrot.slane %v1807, %v1820
      %v1822 = vcombine.high %v1793, 0.0
      %v1824 = vunpack.c.l.s4 1983009808
      %v1825 = vunpack.c.0.s8 %v1824
      %v1826 = vlaneseq
      %v1827 = vshrl.u32 %v1826, 7
      %v1828 = vsub.s32 %v1825, %v1827
      %v1829 = vrot.slane %v1793, %v1828
      %v1831 = vunpack.c.l.s4 1983009808
      %v1832 = vunpack.c.0.s8 %v1831
      %v1833 = vlaneseq
      %v1834 = vshrl.u32 %v1833, 7
      %v1835 = vsub.s32 %v1832, %v1834
      %v1836 = vrot.slane %v1822, %v1835
      %v1837 = vcombine.low %v1814, %v1829
      %v1838 = vcombine.high %v1814, %v1829
      %v1840 = vunpack.c.l.s4 1934713408
      %v1841 = vunpack.c.0.s8 %v1840
      %v1842 = vlaneseq
      %v1843 = vshrl.u32 %v1842, 7
      %v1844 = vsub.s32 %v1841, %v1843
      %v1845 = vrot.slane %v1837, %v1844
      %v1847 = vunpack.c.l.s4 1934713408
      %v1848 = vunpack.c.0.s8 %v1847
      %v1849 = vlaneseq
      %v1850 = vshrl.u32 %v1849, 7
      %v1851 = vsub.s32 %v1848, %v1850
      %v1852 = vrot.slane %v1838, %v1851
      %v1853 = vcombine.low %v1821, %v1836
      %v1854 = vcombine.high %v1821, %v1836
      %v1856 = vunpack.c.l.s4 1934713408
      %v1857 = vunpack.c.0.s8 %v1856
      %v1858 = vlaneseq
      %v1859 = vshrl.u32 %v1858, 7
      %v1860 = vsub.s32 %v1857, %v1859
      %v1861 = vrot.slane %v1853, %v1860
      %v1863 = vunpack.c.l.s4 1934713408
      %v1864 = vunpack.c.0.s8 %v1863
      %v1865 = vlaneseq
      %v1866 = vshrl.u32 %v1865, 7
      %v1867 = vsub.s32 %v1864, %v1866
      %v1868 = vrot.slane %v1854, %v1867
      %v1869 = vcombine.high %v1845, 0.0
      %v1870 = vcombine.high %v1852, 0.0
      %v1871 = vcombine.high %v1861, 0.0
      %v1872 = vcombine.high %v1868, 0.0
      %v1873 = vcombine.low %v1791, %v1799
      %v1874 = vcombine.high %v1791, %v1799
      %v1876 = vunpack.c.l.s4 1983009808
      %v1877 = vunpack.c.0.s8 %v1876
      %v1878 = vlaneseq
      %v1879 = vshrl.u32 %v1878, 7
      %v1880 = vsub.s32 %v1877, %v1879
      %v1881 = vrot.slane %v1873, %v1880
      %v1883 = vunpack.c.l.s4 1983009808
      %v1884 = vunpack.c.0.s8 %v1883
      %v1885 = vlaneseq
      %v1886 = vshrl.u32 %v1885, 7
      %v1887 = vsub.s32 %v1884, %v1886
      %v1888 = vrot.slane %v1874, %v1887
      %v1889 = vcombine.high %v1795, 0.0
      %v1891 = vunpack.c.l.s4 1983009808
      %v1892 = vunpack.c.0.s8 %v1891
      %v1893 = vlaneseq
      %v1894 = vshrl.u32 %v1893, 7
      %v1895 = vsub.s32 %v1892, %v1894
      %v1896 = vrot.slane %v1795, %v1895
      %v1898 = vunpack.c.l.s4 1983009808
      %v1899 = vunpack.c.0.s8 %v1898
      %v1900 = vlaneseq
      %v1901 = vshrl.u32 %v1900, 7
      %v1902 = vsub.s32 %v1899, %v1901
      %v1903 = vrot.slane %v1889, %v1902
      %v1904 = vcombine.low %v1881, %v1896
      %v1905 = vcombine.high %v1881, %v1896
      %v1907 = vunpack.c.l.s4 1934713408
      %v1908 = vunpack.c.0.s8 %v1907
      %v1909 = vlaneseq
      %v1910 = vshrl.u32 %v1909, 7
      %v1911 = vsub.s32 %v1908, %v1910
      %v1912 = vrot.slane %v1904, %v1911
      %v1914 = vunpack.c.l.s4 1934713408
      %v1915 = vunpack.c.0.s8 %v1914
      %v1916 = vlaneseq
      %v1917 = vshrl.u32 %v1916, 7
      %v1918 = vsub.s32 %v1915, %v1917
      %v1919 = vrot.slane %v1905, %v1918
      %v1920 = vcombine.low %v1888, %v1903
      %v1921 = vcombine.high %v1888, %v1903
      %v1923 = vunpack.c.l.s4 1934713408
      %v1924 = vunpack.c.0.s8 %v1923
      %v1925 = vlaneseq
      %v1926 = vshrl.u32 %v1925, 7
      %v1927 = vsub.s32 %v1924, %v1926
      %v1928 = vrot.slane %v1920, %v1927
      %v1930 = vunpack.c.l.s4 1934713408
      %v1931 = vunpack.c.0.s8 %v1930
      %v1932 = vlaneseq
      %v1933 = vshrl.u32 %v1932, 7
      %v1934 = vsub.s32 %v1931, %v1933
      %v1935 = vrot.slane %v1921, %v1934
      %v1936 = vcombine.high %v1912, 0.0
      %v1937 = vcombine.high %v1919, 0.0
      %v1938 = vcombine.high %v1928, 0.0
      %v1939 = vcombine.high %v1935, 0.0
      %1941 = vrot.lane.b32.xlu0 %v1869, 16
      %v1942 = vpop.permute.xlu0 %1941
      %1945 = vrot.lane.b32.xlu0 %v1852, 32
      %v1946 = vpop.permute.xlu0 %1945
      %1949 = vrot.lane.b32.xlu0 %v1870, 48
      %v1950 = vpop.permute.xlu0 %1949
      %1953 = vrot.lane.b32.xlu0 %v1861, 64
      %v1954 = vpop.permute.xlu0 %1953
      %1957 = vrot.lane.b32.xlu0 %v1871, 80
      %v1958 = vpop.permute.xlu0 %1957
      %1961 = vrot.lane.b32.xlu0 %v1868, 96
      %v1962 = vpop.permute.xlu0 %1961
      %1965 = vrot.lane.b32.xlu0 %v1872, 112
      %v1966 = vpop.permute.xlu0 %1965
      %1969 = vrot.lane.b32.xlu0 %v1936, 16
      %v1970 = vpop.permute.xlu0 %1969
      %1973 = vrot.lane.b32.xlu0 %v1919, 32
      %v1974 = vpop.permute.xlu0 %1973
      %1977 = vrot.lane.b32.xlu0 %v1937, 48
      %v1978 = vpop.permute.xlu0 %1977
      %1981 = vrot.lane.b32.xlu0 %v1928, 64
      %v1982 = vpop.permute.xlu0 %1981
      %1985 = vrot.lane.b32.xlu0 %v1938, 80
      %v1986 = vpop.permute.xlu0 %1985
      %1989 = vrot.lane.b32.xlu0 %v1935, 96
      %v1990 = vpop.permute.xlu0 %1989
      %1993 = vrot.lane.b32.xlu0 %v1939, 112
      %v1994 = vpop.permute.xlu0 %1993
      %v1996 = vsel %vm418, %v1845, %v1942
      %v1997 = vsel %vm420, %v1996, %v1946
      %v1998 = vsel %vm422, %v1997, %v1950
      %v1999 = vsel %vm424, %v1998, %v1954
      %v2000 = vsel %vm426, %v1999, %v1958
      %v2001 = vsel %vm428, %v2000, %v1962
      %v2002 = vsel %vm430, %v2001, %v1966
      %v2003 = vsel %vm418, %v1912, %v1970
      %v2004 = vsel %vm420, %v2003, %v1974
      %v2005 = vsel %vm422, %v2004, %v1978
      %v2006 = vsel %vm424, %v2005, %v1982
      %v2007 = vsel %vm426, %v2006, %v1986
      %v2008 = vsel %vm428, %v2007, %v1990
      %v2009 = vsel %vm430, %v2008, %v1994
      %2010 = vrot.lane.b32.xlu0 %v1565, 126
      %v2011 = vpop.permute.xlu0 %2010
      %2012 = vrot.lane.b32.xlu0 %v1567, 126
      %v2013 = vpop.permute.xlu0 %2012
      %2014 = vrot.lane.b32.xlu0 %v1570, 126
      %v2015 = vpop.permute.xlu0 %2014
      %2016 = vrot.lane.b32.xlu0 %v1572, 126
      %v2017 = vpop.permute.xlu0 %2016
      %2018 = vrot.lane.b32.xlu0 %v1575, 126
      %v2019 = vpop.permute.xlu0 %2018
      %2020 = vrot.lane.b32.xlu0 %v1577, 126
      %v2021 = vpop.permute.xlu0 %2020
      %v2028 = vcombine.low %v2011, %v2019
      %v2029 = vcombine.high %v2011, %v2019
      %v2031 = vunpack.c.l.s4 1983009808
      %v2032 = vunpack.c.0.s8 %v2031
      %v2033 = vlaneseq
      %v2034 = vshrl.u32 %v2033, 7
      %v2035 = vsub.s32 %v2032, %v2034
      %v2036 = vrot.slane %v2028, %v2035
      %v2038 = vunpack.c.l.s4 1983009808
      %v2039 = vunpack.c.0.s8 %v2038
      %v2040 = vlaneseq
      %v2041 = vshrl.u32 %v2040, 7
      %v2042 = vsub.s32 %v2039, %v2041
      %v2043 = vrot.slane %v2029, %v2042
      %v2044 = vcombine.high %v2015, 0.0
      %v2046 = vunpack.c.l.s4 1983009808
      %v2047 = vunpack.c.0.s8 %v2046
      %v2048 = vlaneseq
      %v2049 = vshrl.u32 %v2048, 7
      %v2050 = vsub.s32 %v2047, %v2049
      %v2051 = vrot.slane %v2015, %v2050
      %v2053 = vunpack.c.l.s4 1983009808
      %v2054 = vunpack.c.0.s8 %v2053
      %v2055 = vlaneseq
      %v2056 = vshrl.u32 %v2055, 7
      %v2057 = vsub.s32 %v2054, %v2056
      %v2058 = vrot.slane %v2044, %v2057
      %v2059 = vcombine.low %v2036, %v2051
      %v2060 = vcombine.high %v2036, %v2051
      %v2062 = vunpack.c.l.s4 1934713408
      %v2063 = vunpack.c.0.s8 %v2062
      %v2064 = vlaneseq
      %v2065 = vshrl.u32 %v2064, 7
      %v2066 = vsub.s32 %v2063, %v2065
      %v2067 = vrot.slane %v2059, %v2066
      %v2069 = vunpack.c.l.s4 1934713408
      %v2070 = vunpack.c.0.s8 %v2069
      %v2071 = vlaneseq
      %v2072 = vshrl.u32 %v2071, 7
      %v2073 = vsub.s32 %v2070, %v2072
      %v2074 = vrot.slane %v2060, %v2073
      %v2075 = vcombine.low %v2043, %v2058
      %v2076 = vcombine.high %v2043, %v2058
      %v2078 = vunpack.c.l.s4 1934713408
      %v2079 = vunpack.c.0.s8 %v2078
      %v2080 = vlaneseq
      %v2081 = vshrl.u32 %v2080, 7
      %v2082 = vsub.s32 %v2079, %v2081
      %v2083 = vrot.slane %v2075, %v2082
      %v2085 = vunpack.c.l.s4 1934713408
      %v2086 = vunpack.c.0.s8 %v2085
      %v2087 = vlaneseq
      %v2088 = vshrl.u32 %v2087, 7
      %v2089 = vsub.s32 %v2086, %v2088
      %v2090 = vrot.slane %v2076, %v2089
      %v2091 = vcombine.high %v2067, 0.0
      %v2092 = vcombine.high %v2074, 0.0
      %v2093 = vcombine.high %v2083, 0.0
      %v2094 = vcombine.high %v2090, 0.0
      %v2095 = vcombine.low %v2013, %v2021
      %v2096 = vcombine.high %v2013, %v2021
      %v2098 = vunpack.c.l.s4 1983009808
      %v2099 = vunpack.c.0.s8 %v2098
      %v2100 = vlaneseq
      %v2101 = vshrl.u32 %v2100, 7
      %v2102 = vsub.s32 %v2099, %v2101
      %v2103 = vrot.slane %v2095, %v2102
      %v2105 = vunpack.c.l.s4 1983009808
      %v2106 = vunpack.c.0.s8 %v2105
      %v2107 = vlaneseq
      %v2108 = vshrl.u32 %v2107, 7
      %v2109 = vsub.s32 %v2106, %v2108
      %v2110 = vrot.slane %v2096, %v2109
      %v2111 = vcombine.high %v2017, 0.0
      %v2113 = vunpack.c.l.s4 1983009808
      %v2114 = vunpack.c.0.s8 %v2113
      %v2115 = vlaneseq
      %v2116 = vshrl.u32 %v2115, 7
      %v2117 = vsub.s32 %v2114, %v2116
      %v2118 = vrot.slane %v2017, %v2117
      %v2120 = vunpack.c.l.s4 1983009808
      %v2121 = vunpack.c.0.s8 %v2120
      %v2122 = vlaneseq
      %v2123 = vshrl.u32 %v2122, 7
      %v2124 = vsub.s32 %v2121, %v2123
      %v2125 = vrot.slane %v2111, %v2124
      %v2126 = vcombine.low %v2103, %v2118
      %v2127 = vcombine.high %v2103, %v2118
      %v2129 = vunpack.c.l.s4 1934713408
      %v2130 = vunpack.c.0.s8 %v2129
      %v2131 = vlaneseq
      %v2132 = vshrl.u32 %v2131, 7
      %v2133 = vsub.s32 %v2130, %v2132
      %v2134 = vrot.slane %v2126, %v2133
      %v2136 = vunpack.c.l.s4 1934713408
      %v2137 = vunpack.c.0.s8 %v2136
      %v2138 = vlaneseq
      %v2139 = vshrl.u32 %v2138, 7
      %v2140 = vsub.s32 %v2137, %v2139
      %v2141 = vrot.slane %v2127, %v2140
      %v2142 = vcombine.low %v2110, %v2125
      %v2143 = vcombine.high %v2110, %v2125
      %v2145 = vunpack.c.l.s4 1934713408
      %v2146 = vunpack.c.0.s8 %v2145
      %v2147 = vlaneseq
      %v2148 = vshrl.u32 %v2147, 7
      %v2149 = vsub.s32 %v2146, %v2148
      %v2150 = vrot.slane %v2142, %v2149
      %v2152 = vunpack.c.l.s4 1934713408
      %v2153 = vunpack.c.0.s8 %v2152
      %v2154 = vlaneseq
      %v2155 = vshrl.u32 %v2154, 7
      %v2156 = vsub.s32 %v2153, %v2155
      %v2157 = vrot.slane %v2143, %v2156
      %v2158 = vcombine.high %v2134, 0.0
      %v2159 = vcombine.high %v2141, 0.0
      %v2160 = vcombine.high %v2150, 0.0
      %v2161 = vcombine.high %v2157, 0.0
      %2163 = vrot.lane.b32.xlu0 %v2091, 16
      %v2164 = vpop.permute.xlu0 %2163
      %2167 = vrot.lane.b32.xlu0 %v2074, 32
      %v2168 = vpop.permute.xlu0 %2167
      %2171 = vrot.lane.b32.xlu0 %v2092, 48
      %v2172 = vpop.permute.xlu0 %2171
      %2175 = vrot.lane.b32.xlu0 %v2083, 64
      %v2176 = vpop.permute.xlu0 %2175
      %2179 = vrot.lane.b32.xlu0 %v2093, 80
      %v2180 = vpop.permute.xlu0 %2179
      %2183 = vrot.lane.b32.xlu0 %v2090, 96
      %v2184 = vpop.permute.xlu0 %2183
      %2187 = vrot.lane.b32.xlu0 %v2094, 112
      %v2188 = vpop.permute.xlu0 %2187
      %2191 = vrot.lane.b32.xlu0 %v2158, 16
      %v2192 = vpop.permute.xlu0 %2191
      %2195 = vrot.lane.b32.xlu0 %v2141, 32
      %v2196 = vpop.permute.xlu0 %2195
      %2199 = vrot.lane.b32.xlu0 %v2159, 48
      %v2200 = vpop.permute.xlu0 %2199
      %2203 = vrot.lane.b32.xlu0 %v2150, 64
      %v2204 = vpop.permute.xlu0 %2203
      %2207 = vrot.lane.b32.xlu0 %v2160, 80
      %v2208 = vpop.permute.xlu0 %2207
      %2211 = vrot.lane.b32.xlu0 %v2157, 96
      %v2212 = vpop.permute.xlu0 %2211
      %2215 = vrot.lane.b32.xlu0 %v2161, 112
      %v2216 = vpop.permute.xlu0 %2215
      %v2218 = vsel %vm418, %v2067, %v2164
      %v2219 = vsel %vm420, %v2218, %v2168
      %v2220 = vsel %vm422, %v2219, %v2172
      %v2221 = vsel %vm424, %v2220, %v2176
      %v2222 = vsel %vm426, %v2221, %v2180
      %v2223 = vsel %vm428, %v2222, %v2184
      %v2224 = vsel %vm430, %v2223, %v2188
      %v2225 = vsel %vm418, %v2134, %v2192
      %v2226 = vsel %vm420, %v2225, %v2196
      %v2227 = vsel %vm422, %v2226, %v2200
      %v2228 = vsel %vm424, %v2227, %v2204
      %v2229 = vsel %vm426, %v2228, %v2208
      %v2230 = vsel %vm428, %v2229, %v2212
      %v2231 = vsel %vm430, %v2230, %v2216
      %v2234 = vrot.slane %v659, 5
      %v2235 = vrot.slane %v666, 5
      %v2240 = vrot.slane %v881, 2
      %v2241 = vrot.slane %v888, 2
      %v2246 = vrot.slane %v1110, 7
      %v2247 = vrot.slane %v1117, 7
      %v2252 = vrot.slane %v1332, 4
      %v2253 = vrot.slane %v1339, 4
      %v2258 = vrot.slane %v1554, 1
      %v2259 = vrot.slane %v1561, 1
      %v2264 = vrot.slane %v1780, 6
      %v2265 = vrot.slane %v1787, 6
      %v2270 = vrot.slane %v2002, 3
      %v2271 = vrot.slane %v2009, 3
      %vm2274 = vcmask 1042432
      %v2275 = vsel %vm2274, %v431, %v2234
      %v2276 = vsel %vm2274, %v438, %v2235
      %v2277 = vsel %vm1562, %v2275, %v2240
      %v2278 = vsel %vm1562, %v2276, %v2241
      %vm2279 = vcmask 1040384
      %v2280 = vsel %vm2279, %v2240, %v2246
      %v2281 = vsel %vm2279, %v2241, %v2247
      %vm2282 = vcmask 1043456
      %v2283 = vsel %vm2282, %v2280, %v2252
      %v2284 = vsel %vm2282, %v2281, %v2253
      %v2285 = vsel %vm892, %v2283, %v2258
      %v2286 = vsel %vm892, %v2284, %v2259
      %vm2287 = vcmask 1041408
      %v2288 = vsel %vm2287, %v2258, %v2264
      %v2289 = vsel %vm2287, %v2259, %v2265
      %vm2290 = vcmask 1044480
      %v2291 = vsel %vm2290, %v2288, %v2270
      %v2292 = vsel %vm2290, %v2289, %v2271
      %v2293 = vld [vmem:[%s1] sm:$0xff]
      %v2294 = vld [vmem:[%s1 + $0x8] sm:$0xff]
      %v2295 = vld [vmem:[%s1 + $0x10] sm:$0xff]
      %v2296 = vld [vmem:[%s1 + $0x18] sm:$0xff]
      %v2297 = vld [vmem:[%s2] sm:$0xff]
      %v2298 = vld [vmem:[%s2 + $0x8] sm:$0xff]
      %v2299 = vld [vmem:[%s2 + $0x10] sm:$0xff]
      %v2300 = vld [vmem:[%s2 + $0x18] sm:$0xff]
      %2302 = vset.pattern.permute.xlu0 0
      %2303 = vperm.xlu0 %2302, %v2297
      %v2304 = vpop.permute.xlu0 %2303
      %2307 = vset.pattern.permute.xlu0 0
      %2308 = vperm.xlu0 %2307, %v2298
      %v2309 = vpop.permute.xlu0 %2308
      %2312 = vset.pattern.permute.xlu0 0
      %2313 = vperm.xlu0 %2312, %v2299
      %v2314 = vpop.permute.xlu0 %2313
      %2317 = vset.pattern.permute.xlu0 0
      %2318 = vperm.xlu0 %2317, %v2300
      %v2319 = vpop.permute.xlu0 %2318
      %vm2321 = vcmask 220160
      %v2323 = vsel %vm2321, %v2293, 0
      %v2326 = vsel %vm2321, %v2294, 0
      %v2329 = vsel %vm2321, %v2295, 0
      %v2332 = vsel %vm2321, %v2296, 0
      %v2335 = vsel %vm2274, %v2224, 0
      %v2338 = vsel %vm2274, %v2231, 0
      %2340 = vmatprep.subr.mxu0 %v2278
      %2341 = vmatpush1.msra.mxu0 %v2277
      %2342 = vmatprep.subr.mxu0 %v2286
      %2343 = vmatpush1.msra.mxu0 %v2285
      %2344 = vmatprep.subr.mxu0 %v2292
      %2345 = vmatpush1.msra.mxu0 %v2291
      %2346 = vmatprep.subr.mxu0 %v2338
      %2347 = vmatpush1.msra.mxu0 %v2335
      %2348 = vmatprep.subr.mxu0 0.0
      %2349 = vmatpush1.msra.mxu0 0.0
      %2350 = vmatprep.subr.mxu0 0.0
      %2351 = vmatpush1.msra.mxu0 0.0
      %2352 = vmatprep.subr.mxu0 0.0
      %2353 = vmatpush1.msra.mxu0 0.0
      %2354 = vmatprep.subr.mxu0 0.0
      %2355 = vmatpush1.msra.mxu0 0.0
      %2356 = vmatprep.subr.mxu0 0.0
      %2357 = vmatpush1.msra.mxu0 0.0
      %2358 = vmatprep.subr.mxu0 0.0
      %2359 = vmatpush1.msra.mxu0 0.0
      %2360 = vmatprep.subr.mxu0 0.0
      %2361 = vmatpush1.msra.mxu0 0.0
      %2362 = vmatprep.subr.mxu0 0.0
      %2363 = vmatpush1.msra.mxu0 0.0
      %2364 = vmatprep.subr.mxu0 0.0
      %2365 = vmatpush1.msra.mxu0 0.0
      %2366 = vmatprep.subr.mxu0 0.0
      %2367 = vmatpush1.msra.mxu0 0.0
      %2368 = vmatprep.subr.mxu0 0.0
      %2369 = vmatpush1.msra.mxu0 0.0
      %2370 = vmatprep.subr.mxu0 0.0
      %2371 = vmatpush1.msra.mxu0 0.0
      %2372 = vmatprep.subr.mxu0 0.0
      %2373 = vmatpush1.msra.mxu0 0.0
      %2374 = vmatprep.subr.mxu0 0.0
      %2375 = vmatpush1.msra.mxu0 0.0
      %2376 = vmatprep.subr.mxu0 0.0
      %2377 = vmatpush1.msra.mxu0 0.0
      %2378 = vmatprep.subr.mxu0 0.0
      %2379 = vmatpush1.msra.mxu0 0.0
      %2380 = vmatprep.subr.mxu0 0.0
      %2381 = vmatpush1.msra.mxu0 0.0
      %2382 = vmatprep.subr.mxu0 0.0
      %2383 = vmatpush1.msra.mxu0 0.0
      %2384 = vmatprep.subr.mxu0 0.0
      %2385 = vmatpush1.msra.mxu0 0.0
      %2386 = vmatprep.subr.mxu0 0.0
      %2387 = vmatpush1.msra.mxu0 0.0
      %2388 = vmatprep.subr.mxu0 0.0
      %2389 = vmatpush1.msra.mxu0 0.0
      %2390 = vmatprep.subr.mxu0 0.0
      %2391 = vmatpush1.msra.mxu0 0.0
      %2392 = vmatprep.subr.mxu0 0.0
      %2393 = vmatpush1.msra.mxu0 0.0
      %2394 = vmatprep.subr.mxu0 0.0
      %2395 = vmatpush1.msra.mxu0 0.0
      %2396 = vmatprep.subr.mxu0 0.0
      %2397 = vmatpush1.msra.mxu0 0.0
      %2398 = vmatprep.subr.mxu0 0.0
      %2399 = vmatpush1.msra.mxu0 0.0
      %2400 = vmatprep.subr.mxu0 0.0
      %2401 = vmatpush1.msra.mxu0 0.0
      %2402 = vmatprep.subr.mxu0 0.0
      %2403 = vmatpush1.msra.mxu0 0.0
      %2404 = vmatprep.mubr.f32.mxu0 0.0
      %2405 = vmatmul.mubr.f32.gmra.mrb[0].mxu0 %v2323
      %v2406 = vpop.f32.mrb[0].mxu0
      %v2407 = vadd.f32 %v2304, %v2406
      %v2408 = vpop.f32.mrb[0].mxu0
      %v2409 = vadd.f32 %v2304, %v2408
      %2410 = vmatprep.mubr.f32.mxu0 0.0
      %2411 = vmatmul.mubr.f32.gmra.mrb[0].mxu0 %v2326
      %v2412 = vpop.f32.mrb[0].mxu0
      %v2413 = vadd.f32 %v2309, %v2412
      %v2414 = vpop.f32.mrb[0].mxu0
      %v2415 = vadd.f32 %v2309, %v2414
      %2416 = vmatprep.mubr.f32.mxu0 0.0
      %2417 = vmatmul.mubr.f32.gmra.mrb[0].mxu0 %v2329
      %v2418 = vpop.f32.mrb[0].mxu0
      %v2419 = vadd.f32 %v2314, %v2418
      %v2420 = vpop.f32.mrb[0].mxu0
      %v2421 = vadd.f32 %v2314, %v2420
      %2422 = vmatprep.mubr.f32.mxu0 0.0
      %2423 = vmatmul.mubr.f32.gmra.mrb[0].mxu0 %v2332
      %v2424 = vpop.f32.mrb[0].mxu0
      %v2425 = vadd.f32 %v2319, %v2424
      %v2426 = vpop.f32.mrb[0].mxu0
      %v2427 = vadd.f32 %v2319, %v2426
      %2428 = vdwg.mxu0
      %2429 = vst [vmem:[%s170] sm:$0xff] %v2407
      %2430 = vst [vmem:[%s170 + $0x8] sm:$0xff] %v2409
      %2431 = vst [vmem:[%s170 + $0x10] sm:$0xff] %v2413
      %2432 = vst [vmem:[%s170 + $0x18] sm:$0xff] %v2415
      %2433 = vst [vmem:[%s170 + $0x20] sm:$0xff] %v2419
      %2434 = vst [vmem:[%s170 + $0x28] sm:$0xff] %v2421
      %2435 = vst [vmem:[%s170 + $0x30] sm:$0xff] %v2425
      %2436 = vst [vmem:[%s170 + $0x38] sm:$0xff] %v2427
      %p2437 = scmp.lt.s32.totalorder %s14, 1
      %s2438 = scalar_select %p2437, %s14, 1
      %s2439 = smul.addr %s2438, 8
      %s2440 = smul.addr %s2439, 8
      %s2441 = scalar_lea.vmem %s3, %s2440
      // Predicated region
      $region33: #{model_forward.1} parent=31 // pred_check
        %p2442 = pneg %p100
      $region34: #{model_forward.1} parent=31 // pred_check_branch
        %2444 = sbr.rel (%p2442) target = $region36
      $region35: #{model_forward.1} parent=31 // pred_region
        _
      $region36: #{model_forward.1} parent=31 // pred_fallthru
        _
    $region32: #{model_forward.1} parent=5 // pred_fallthru
      _
    %p2445 = scmp.le.s32.totalorder 2, %s9
    // Predicated region
    $region37: #{model_forward.1} parent=5 // pred_check
      %p2446 = pneg %p2445
    $region38: #{model_forward.1} parent=5 // pred_check_branch
      %2448 = sbr.rel (%p2446) target = $region40
    $region39: #{model_forward.1} parent=5 // pred_region
      %s2449 = ssub.s32 %s9, 2
      // Predicated region
      $region41: #{model_forward.1} parent=39 // pred_check
        %p2450 = pneg %p106
      $region42: #{model_forward.1} parent=39 // pred_check_branch
        %2452 = sbr.rel (%p2450) target = $region44
      $region43: #{model_forward.1} parent=39 // pred_region
        %p2453 = scmp.lt.s32.totalorder %s15, 1
        %s2454 = scalar_select %p2453, %s15, 1
        %s2455 = smul.addr %s2454, 8
        %s2456 = smul.addr %s2455, 8
        %s2457 = scalar_lea.vmem %s3, %s2456
      $region44: #{model_forward.1} parent=39 // pred_fallthru
        _
    $region40: #{model_forward.1} parent=5 // pred_fallthru
      _
  $region6: #{model_forward.1} parent=0 // loop_footer
    %s13 = sadd.s32 1, %s9
  $region7: #{model_forward.1} parent=0 // loop_footer_branch
    %8 = sbr.rel target = $region3
  $region8: #{model_forward.1} parent=0 // loop_exit
    _

</llo_original>
